<compile_context>
chip_gen: v6e
topology: v6e:2x2x1
jax: 0.10.0
libtpu: 0.0.40
codegen_flags: <defaults>
</compile_context>

<pallas_src>
import jax
import jax.numpy as jnp
from jax import lax
from jax.experimental import pallas as pl
from jax.experimental.pallas import tpu as pltpu


def _round_up(x, m):
    return (x + m - 1) // m * m


def _pad_gate_cols(w, H, Hp):
    """(rows, 4H) -> (rows, 4Hp): zero-pad each i/f/g/o gate chunk to Hp cols."""
    if Hp == H:
        return w
    parts = [jnp.pad(w[:, g * H:(g + 1) * H], ((0, 0), (0, Hp - H)))
             for g in range(4)]
    return jnp.concatenate(parts, axis=1)


# --------------------------- Kernel 1: LSTM --------------------------------
def _lstm_kernel(x_ref, wih_ref, whh_ref, b_ref, h_tm_ref, gx_ref):
    """LSTM recurrence for one batch block.

    x_ref:    (T*Bb, E)   bf16, blocked time-major rows (row = t*Bb + b_local)
    wih_ref:  (E, 4Hp)    bf16
    whh_ref:  (Hp, 4Hp)   bf16
    b_ref:    (1, 4Hp)    f32  (= b_ih + b_hh, gate-padded)
    h_tm_ref: (T, Bb, Hp) f32  output, TIME-major: every per-step store is an
              unmasked full-tile store at a leading index (no vst.msk RMW).
    gx_ref:   (T*Bb, 4Hp) f32  VMEM scratch holding the hoisted x-projection.
    """
    T, Bb, Hp = h_tm_ref.shape

    # Hoisted input projection: ONE big (T*Bb, E) @ (E, 4Hp) matmul (+ bias);
    # only the unavoidable h @ W_hh stays inside the serial loop.
    gx_ref[...] = (
        jnp.dot(x_ref[...], wih_ref[...], preferred_element_type=jnp.float32)
        + b_ref[...]
    )

    w_hh = whh_ref[...]  # hoisted ref load (no CSE on ref loads in the loop)

    h0 = jnp.zeros((Bb, Hp), jnp.float32)
    c0 = jnp.zeros((Bb, Hp), jnp.float32)

    def step(t, h, c, gx_t):
        gates = gx_t + jnp.dot(h.astype(jnp.bfloat16), w_hh,
                               preferred_element_type=jnp.float32)  # (Bb, 4Hp)
        # Hp is a multiple of 128 -> every gate slice is a lane-aligned view.
        # Gate nonlinearities stay f32 (v5e has no bf16 VPU/EUP).
        i_g = jax.nn.sigmoid(gates[:, 0 * Hp:1 * Hp])
        f_g = jax.nn.sigmoid(gates[:, 1 * Hp:2 * Hp])
        g_g = jnp.tanh(gates[:, 2 * Hp:3 * Hp])
        o_g = jax.nn.sigmoid(gates[:, 3 * Hp:4 * Hp])
        c = f_g * c + i_g * g_g
        h = o_g * jnp.tanh(c)
        h_tm_ref[t] = h            # time-major: full-tile leading-index store
        return h, c

    if T <= 32:
        # Short sequences: full static unroll (static slice / store indices).
        h, c = h0, c0
        for t in range(T):
            h, c = step(t, h, c, gx_ref[t * Bb:(t + 1) * Bb, :])
    else:
        # Long sequences: bounded unroll so T live slabs don't blow 64 vregs.
        def body(t, carry):
            h, c = carry
            off = t * Bb
            if Bb % 8 == 0:
                off = pl.multiple_of(off, 8)
            return step(t, h, c, gx_ref[pl.ds(off, Bb), :])
        lax.fori_loop(0, T, body, (h0, c0), unroll=2)
    # Dropout(p=0.25) is identity in eval mode -- nothing to do here.


# --------------------------- Kernel 2: fc -----------------------------------
def _fc_kernel(h_ref, w_ref, b_ref, o_ref):
    """Output projection for one (batch-block, V-tile).

    h_ref: (Bb2, T, Hp) bf16   w_ref: (Hp, Vt) bf16   b_ref: (1, Vt) f32
    o_ref: (Bb2, T, Vt) f32 -- logits are written directly in (B, T, V)
    layout, so the wrapper needs no HBM relayout of the logits.
    """
    w = w_ref[...]
    bias = b_ref[...]
    # TODO(synk): fold the per-b matmuls into a single (Bb2*T, Hp) @ (Hp, Vt)
    # MXU call once an in-kernel row-merge of the (Bb2, T, Hp) block is
    # expressible without a relayout (T is not sublane-aligned in general).
    for b_i in range(h_ref.shape[0]):
        acc = jnp.dot(h_ref[b_i], w, preferred_element_type=jnp.float32)  # (T, Vt)
        o_ref[b_i] = (acc + bias).astype(o_ref.dtype)


# --------------------------- Wrapper ----------------------------------------
def decoder_rnn_forward(features, captions, params):
    """features: (B, E) f32, captions: (B, Tc) int32. Returns (B, Tc, V) f32."""
    emb_table = params["embedding"]          # (V, E)
    w_ih = params["w_ih"]                    # (E, 4H)
    w_hh = params["w_hh"]                    # (H, 4H)
    b = params["b"]                          # (1, 4H)  (= b_ih + b_hh)
    w_fc = params["w_fc"]                    # (H, V)
    b_fc = params["b_fc"]                    # (1, V)

    B, E = features.shape
    H = w_hh.shape[0]
    V = w_fc.shape[1]
    Hp = _round_up(H, 128)

    # Pad the hidden dim so gate slices are lane-aligned. Padded gate columns
    # get zero weight+bias: i=f=o=sigmoid(0)=0.5, g=tanh(0)=0, so padded c/h
    # stay exactly 0 and never leak into real outputs (W_fc pad rows are 0).
    w_ih_p = _pad_gate_cols(w_ih, H, Hp)
    w_hh_p = _pad_gate_cols(jnp.pad(w_hh, ((0, Hp - H), (0, 0))), H, Hp)
    b_p = _pad_gate_cols(b, H, Hp)
    w_fc_p = jnp.pad(w_fc, ((0, Hp - H), (0, 0)))

    # Build the LSTM input time-major straight from the gather -- only the
    # tiny int caption-id matrix is transposed, never a big activation tensor.
    # TODO(synk): fuse this gather into kernel 1 via scalar-prefetched ids.
    T = captions.shape[1]                                        # Tc
    cap_tm = captions[:, :-1].T                                  # (T-1, B)
    emb_tm = jnp.take(emb_table, cap_tm, axis=0)                 # (T-1, B, E)
    x_tm = jnp.concatenate([features[None, :, :], emb_tm], 0)    # (T, B, E)

    # Batch blocking: >=2 "parallel" blocks whenever B allows, so a 2-TC chip
    # (v7x) can shard the recurrence; blocks stay a multiple of 8 sublanes.
    Bb = B // 2 if B % 16 == 0 else B
    nB = B // Bb

    # Blocked time-major 2-D input slab: row = i*(T*Bb) + t*Bb + b_local.
    x2d = (x_tm.reshape(T, nB, Bb, E).transpose(1, 0, 2, 3)
           .reshape(nB * T * Bb, E).astype(jnp.bfloat16))

    wih_bf = w_ih_p.astype(jnp.bfloat16)
    whh_bf = w_hh_p.astype(jnp.bfloat16)
    wfc_bf = w_fc_p.astype(jnp.bfloat16)
    b_f32 = b_p.astype(jnp.float32)
    bfc_f32 = b_fc.astype(jnp.float32)

    # ---- Kernel 1: LSTM recurrence -> h time-major (T, B, Hp) f32 ----------
    lstm_cost = pl.CostEstimate(
        flops=int(2 * T * B * (E + Hp) * 4 * Hp),
        transcendentals=int(5 * T * B * Hp),
        bytes_accessed=int(T * B * E * 2 + (E + Hp) * 4 * Hp * 2
                           + 4 * Hp * 4 + T * B * Hp * 4),
    )
    h_tm = pl.pallas_call(
        _lstm_kernel,
        out_shape=jax.ShapeDtypeStruct((T, B, Hp), jnp.float32),
        grid_spec=pltpu.PrefetchScalarGridSpec(
            num_scalar_prefetch=0,
            grid=(nB,),
            in_specs=[
                pl.BlockSpec((T * Bb, E), lambda i: (i, 0)),      # x slab
                pl.BlockSpec((E, 4 * Hp), lambda i: (0, 0)),      # W_ih
                pl.BlockSpec((Hp, 4 * Hp), lambda i: (0, 0)),     # W_hh
                pl.BlockSpec((1, 4 * Hp), lambda i: (0, 0)),      # bias
            ],
            out_specs=pl.BlockSpec((T, Bb, Hp), lambda i: (0, i, 0)),
            scratch_shapes=[pltpu.VMEM((T * Bb, 4 * Hp), jnp.float32)],
        ),
        compiler_params=pltpu.CompilerParams(
            # TODO(synk): use pltpu.CORE_PARALLEL here for explicit 2-TC
            # sharding on v7x; "parallel" keeps it portable across generations.
            dimension_semantics=("parallel",),
        ),
        cost_estimate=lstm_cost,
    )(x2d, wih_bf, whh_bf, b_f32)

    # One small XLA relayout of the Hp-wide h tensor (instead of relayouting
    # the V-wide logits); bf16 cast halves fc's repeated h reads across V tiles.
    h_bt = jnp.swapaxes(h_tm, 0, 1).astype(jnp.bfloat16)         # (B, T, Hp)

    # ---- Kernel 2: hoisted fc, 2-D grid (batch block x V tile) -------------
    Vt = min(V, 2048)
    # Keep the f32 output tile ~<=4 MiB so (out + weight) double-buffered fits
    # the default scoped VMEM on every generation (16 MiB v5e, 32 MiB v6e/v7x).
    Bb2 = max(1, min(B, (4 * 1024 * 1024 // (Vt * 4)) // T))
    nB2 = pl.cdiv(B, Bb2)
    nV = pl.cdiv(V, Vt)

    fc_cost = pl.CostEstimate(
        flops=int(2 * B * T * Hp * V),
        transcendentals=0,
        bytes_accessed=int(nV * B * T * Hp * 2 + Hp * V * 2 + V * 4
                           + B * T * V * 4),
    )
    # TODO(synk): emit bf16 logits here if the consumer is softmax/argmax/loss
    # (halves the dominant HBM write stream); kept f32 to match the reference.
    logits = pl.pallas_call(
        _fc_kernel,
        out_shape=jax.ShapeDtypeStruct((B, T, V), jnp.float32),
        grid_spec=pltpu.PrefetchScalarGridSpec(
            num_scalar_prefetch=0,
            grid=(nB2, nV),
            in_specs=[
                pl.BlockSpec((Bb2, T, Hp), lambda i, j: (i, 0, 0)),  # hidden
                pl.BlockSpec((Hp, Vt), lambda i, j: (0, j)),         # W_fc tile
                pl.BlockSpec((1, Vt), lambda i, j: (0, j)),          # b_fc tile
            ],
            out_specs=pl.BlockSpec((Bb2, T, Vt), lambda i, j: (i, 0, j)),
        ),
        compiler_params=pltpu.CompilerParams(
            dimension_semantics=("parallel", "parallel"),
        ),
        cost_estimate=fc_cost,
    )(h_bt, wfc_bf, bfc_f32)

    return logits     # already (B, T, V) batch-first -- no relayout needed


# --------------------------- Params / reference -----------------------------
def init_params(key, embed_size, hidden_size, vocab_size):
    ks = jax.random.split(key, 7)
    scale = 0.1
    emb = scale * jax.random.normal(ks[0], (vocab_size, embed_size), jnp.float32)
    w_ih = scale * jax.random.normal(ks[1], (embed_size, 4 * hidden_size), jnp.float32)
    w_hh = scale * jax.random.normal(ks[2], (hidden_size, 4 * hidden_size), jnp.float32)
    b_ih = scale * jax.random.normal(ks[3], (4 * hidden_size,), jnp.float32)
    b_hh = scale * jax.random.normal(ks[4], (4 * hidden_size,), jnp.float32)
    w_fc = scale * jax.random.normal(ks[5], (hidden_size, vocab_size), jnp.float32)
    b_fc = scale * jax.random.normal(ks[6], (vocab_size,), jnp.float32)
    # NOTE: PyTorch stores weight_ih/hh as (4H, in) and fc.weight as (V, H);
    # real checkpoint loading must transpose into this (in, out) layout while
    # preserving the i, f, g, o gate-chunk order along the 4H axis.
    return {
        "embedding": emb,
        "w_ih": w_ih,
        "w_hh": w_hh,
        "b": (b_ih + b_hh)[None, :],
        "w_fc": w_fc,
        "b_fc": b_fc[None, :],
    }


def _reference_forward(features, captions, params):
    """Pure-JAX f32 reference matching the PyTorch module (eval mode)."""
    H = params["w_hh"].shape[0]
    emb = jnp.take(params["embedding"], captions[:, :-1], axis=0)   # (B,T-1,E)
    x = jnp.concatenate([features[:, None, :], emb], axis=1)        # (B,T,E)
    B = x.shape[0]

    def cell(carry, x_t):
        h, c = carry
        gates = x_t @ params["w_ih"] + h @ params["w_hh"] + params["b"][0]
        i = jax.nn.sigmoid(gates[:, 0 * H:1 * H])
        f = jax.nn.sigmoid(gates[:, 1 * H:2 * H])
        g = jnp.tanh(gates[:, 2 * H:3 * H])
        o = jax.nn.sigmoid(gates[:, 3 * H:4 * H])
        c = f * c + i * g
        h = o * jnp.tanh(c)
        return (h, c), h

    init = (jnp.zeros((B, H), jnp.float32), jnp.zeros((B, H), jnp.float32))
    _, h_tm = jax.lax.scan(cell, init, jnp.swapaxes(x, 0, 1))       # (T,B,H)
    h_bt = jnp.swapaxes(h_tm, 0, 1)                                 # (B,T,H)
    return h_bt @ params["w_fc"] + params["b_fc"][0]


if __name__ == "__main__":
    # Small shapes: batch=8, embed=32, hidden=32, vocab=128, caption length=9.
    B, E, H, V, Tc = 8, 32, 32, 128, 9

    key = jax.random.PRNGKey(0)
    k_feat, k_cap, k_par = jax.random.split(key, 3)

    features = jax.random.normal(k_feat, (B, E), jnp.float32)
    captions = jax.random.randint(k_cap, (B, Tc), 0, V, jnp.int32)
    params = init_params(k_par, E, H, V)

    logits = decoder_rnn_forward(features, captions, params)
    jax.block_until_ready(logits)

    assert logits.shape == (B, Tc, V), logits.shape
    assert logits.dtype == jnp.float32

    # bf16 MXU inputs with f32 accumulation: tolerance check, not bit-exact.
    ref = _reference_forward(features, captions, params)
    max_err = float(jnp.max(jnp.abs(logits - ref)))
    assert max_err < 5e-2, f"max abs err vs f32 reference: {max_err}"

    print("KERNEL_OK")
</pallas_src>

<mosaic_0001>
module attributes {stable_mosaic.version = 11 : i64} {
  func.func @_lstm_kernel(%arg0: i32, %arg1: memref<72x32xbf16, #tpu.memory_space<vmem>>, %arg2: memref<32x512xbf16, #tpu.memory_space<vmem>>, %arg3: memref<128x512xbf16, #tpu.memory_space<vmem>>, %arg4: memref<1x512xf32, #tpu.memory_space<vmem>>, %arg5: memref<9x8x128xf32, #tpu.memory_space<vmem>>, %arg6: memref<72x512xf32, #tpu.memory_space<vmem>>) attributes {dimension_semantics = [#tpu.dimension_semantics<parallel>], iteration_bounds = array<i64: 1>, scalar_prefetch = 0 : i64, scratch_operands = 1 : i64, tpu.core_type = #tpu.core_type<tc>, window_params = [{transform_indices = @transform_0, window_bounds = array<i64: 72, 32>}, {pipeline_mode = #tpu.pipeline_mode<synchronous>, transform_indices = @transform_1, window_bounds = array<i64: 32, 512>}, {pipeline_mode = #tpu.pipeline_mode<synchronous>, transform_indices = @transform_2, window_bounds = array<i64: 128, 512>}, {pipeline_mode = #tpu.pipeline_mode<synchronous>, transform_indices = @transform_3, window_bounds = array<i64: 1, 512>}, {transform_indices = @transform_4, window_bounds = array<i64: 9, 8, 128>}]} {
    %c0 = arith.constant 0 : index
    %c0_0 = arith.constant 0 : index
    %0 = vector.load %arg1[%c0, %c0_0] : memref<72x32xbf16, #tpu.memory_space<vmem>>, vector<72x32xbf16>
    %c0_1 = arith.constant 0 : index
    %c0_2 = arith.constant 0 : index
    %1 = vector.load %arg2[%c0_1, %c0_2] : memref<32x512xbf16, #tpu.memory_space<vmem>>, vector<32x512xbf16>
    %cst = arith.constant dense<0.000000e+00> : vector<72x512xf32>
    %2 = tpu.matmul %0, %1, %cst {dimension_numbers = #tpu.dot_dimension_numbers<[1], [0], [0], [1], [0, 0, 1, 1], [], []>} : vector<72x32xbf16>, vector<32x512xbf16>, vector<72x512xf32> -> vector<72x512xf32>
    %c0_3 = arith.constant 0 : index
    %c0_4 = arith.constant 0 : index
    %3 = vector.load %arg4[%c0_3, %c0_4] : memref<1x512xf32, #tpu.memory_space<vmem>>, vector<1x512xf32>
    %4 = vector.broadcast %3 : vector<1x512xf32> to vector<72x512xf32>
    %5 = arith.addf %2, %4 : vector<72x512xf32>
    %c0_5 = arith.constant 0 : index
    %c0_6 = arith.constant 0 : index
    %6 = vector.load %arg6[%c0_5, %c0_6] : memref<72x512xf32, #tpu.memory_space<vmem>>, vector<72x512xf32>
    tpu.vector_store %arg6[%c0_5, %c0_6], %5 {strides = array<i32>} : memref<72x512xf32, #tpu.memory_space<vmem>>, vector<72x512xf32>,
    %c0_7 = arith.constant 0 : index
    %c0_8 = arith.constant 0 : index
    %7 = vector.load %arg3[%c0_7, %c0_8] : memref<128x512xbf16, #tpu.memory_space<vmem>>, vector<128x512xbf16>
    %cst_9 = arith.constant 0.000000e+00 : f32
    %8 = vector.broadcast %cst_9 : f32 to vector<8x128xf32>
    %cst_10 = arith.constant 0.000000e+00 : f32
    %9 = vector.broadcast %cst_10 : f32 to vector<8x128xf32>
    %c0_11 = arith.constant 0 : index
    %c0_12 = arith.constant 0 : index
    %10 = vector.load %arg6[%c0_11, %c0_12] : memref<72x512xf32, #tpu.memory_space<vmem>>, vector<8x512xf32>
    %11 = arith.truncf %8 : vector<8x128xf32> to vector<8x128xbf16>
    %cst_13 = arith.constant dense<0.000000e+00> : vector<8x512xf32>
    %12 = tpu.matmul %11, %7, %cst_13 {dimension_numbers = #tpu.dot_dimension_numbers<[1], [0], [0], [1], [0, 0, 1, 1], [], []>} : vector<8x128xbf16>, vector<128x512xbf16>, vector<8x512xf32> -> vector<8x512xf32>
    %13 = arith.addf %10, %12 : vector<8x512xf32>
    %14 = vector.extract_strided_slice %13 {offsets = [0, 0], sizes = [8, 128], strides = [1, 1]} : vector<8x512xf32> to vector<8x128xf32>
    %15 = arith.negf %14 : vector<8x128xf32>
    %16 = math.exp %15 : vector<8x128xf32>
    %cst_14 = arith.constant 1.000000e+00 : f32
    %17 = vector.broadcast %cst_14 : f32 to vector<8x128xf32>
    %18 = arith.addf %17, %16 : vector<8x128xf32>
    %19 = arith.divf %17, %18 : vector<8x128xf32>
    %20 = vector.extract_strided_slice %13 {offsets = [0, 128], sizes = [8, 128], strides = [1, 1]} : vector<8x512xf32> to vector<8x128xf32>
    %21 = arith.negf %20 : vector<8x128xf32>
    %22 = math.exp %21 : vector<8x128xf32>
    %cst_15 = arith.constant 1.000000e+00 : f32
    %23 = vector.broadcast %cst_15 : f32 to vector<8x128xf32>
    %24 = arith.addf %23, %22 : vector<8x128xf32>
    %25 = arith.divf %23, %24 : vector<8x128xf32>
    %26 = vector.extract_strided_slice %13 {offsets = [0, 256], sizes = [8, 128], strides = [1, 1]} : vector<8x512xf32> to vector<8x128xf32>
    %27 = math.tanh %26 : vector<8x128xf32>
    %28 = vector.extract_strided_slice %13 {offsets = [0, 384], sizes = [8, 128], strides = [1, 1]} : vector<8x512xf32> to vector<8x128xf32>
    %29 = arith.negf %28 : vector<8x128xf32>
    %30 = math.exp %29 : vector<8x128xf32>
    %cst_16 = arith.constant 1.000000e+00 : f32
    %31 = vector.broadcast %cst_16 : f32 to vector<8x128xf32>
    %32 = arith.addf %31, %30 : vector<8x128xf32>
    %33 = arith.divf %31, %32 : vector<8x128xf32>
    %34 = arith.mulf %25, %9 : vector<8x128xf32>
    %35 = arith.mulf %19, %27 : vector<8x128xf32>
    %36 = arith.addf %34, %35 : vector<8x128xf32>
    %37 = math.tanh %36 : vector<8x128xf32>
    %38 = arith.mulf %33, %37 : vector<8x128xf32>
    %c0_17 = arith.constant 0 : index
    %c0_18 = arith.constant 0 : index
    %c0_19 = arith.constant 0 : index
    %39 = vector.load %arg5[%c0_17, %c0_18, %c0_19] : memref<9x8x128xf32, #tpu.memory_space<vmem>>, vector<1x8x128xf32>
    %40 = vector.shape_cast %39 : vector<1x8x128xf32> to vector<8x128xf32>
    %41 = vector.shape_cast %38 : vector<8x128xf32> to vector<1x8x128xf32>
    tpu.vector_store %arg5[%c0_17, %c0_18, %c0_19], %41 {strides = array<i32>} : memref<9x8x128xf32, #tpu.memory_space<vmem>>, vector<1x8x128xf32>,
    %c8 = arith.constant 8 : index
    %c0_20 = arith.constant 0 : index
    %42 = vector.load %arg6[%c8, %c0_20] : memref<72x512xf32, #tpu.memory_space<vmem>>, vector<8x512xf32>
    %43 = arith.truncf %38 : vector<8x128xf32> to vector<8x128xbf16>
    %cst_21 = arith.constant dense<0.000000e+00> : vector<8x512xf32>
    %44 = tpu.matmul %43, %7, %cst_21 {dimension_numbers = #tpu.dot_dimension_numbers<[1], [0], [0], [1], [0, 0, 1, 1], [], []>} : vector<8x128xbf16>, vector<128x512xbf16>, vector<8x512xf32> -> vector<8x512xf32>
    %45 = arith.addf %42, %44 : vector<8x512xf32>
    %46 = vector.extract_strided_slice %45 {offsets = [0, 0], sizes = [8, 128], strides = [1, 1]} : vector<8x512xf32> to vector<8x128xf32>
    %47 = arith.negf %46 : vector<8x128xf32>
    %48 = math.exp %47 : vector<8x128xf32>
    %cst_22 = arith.constant 1.000000e+00 : f32
    %49 = vector.broadcast %cst_22 : f32 to vector<8x128xf32>
    %50 = arith.addf %49, %48 : vector<8x128xf32>
    %51 = arith.divf %49, %50 : vector<8x128xf32>
    %52 = vector.extract_strided_slice %45 {offsets = [0, 128], sizes = [8, 128], strides = [1, 1]} : vector<8x512xf32> to vector<8x128xf32>
    %53 = arith.negf %52 : vector<8x128xf32>
    %54 = math.exp %53 : vector<8x128xf32>
    %cst_23 = arith.constant 1.000000e+00 : f32
    %55 = vector.broadcast %cst_23 : f32 to vector<8x128xf32>
    %56 = arith.addf %55, %54 : vector<8x128xf32>
    %57 = arith.divf %55, %56 : vector<8x128xf32>
    %58 = vector.extract_strided_slice %45 {offsets = [0, 256], sizes = [8, 128], strides = [1, 1]} : vector<8x512xf32> to vector<8x128xf32>
    %59 = math.tanh %58 : vector<8x128xf32>
    %60 = vector.extract_strided_slice %45 {offsets = [0, 384], sizes = [8, 128], strides = [1, 1]} : vector<8x512xf32> to vector<8x128xf32>
    %61 = arith.negf %60 : vector<8x128xf32>
    %62 = math.exp %61 : vector<8x128xf32>
    %cst_24 = arith.constant 1.000000e+00 : f32
    %63 = vector.broadcast %cst_24 : f32 to vector<8x128xf32>
    %64 = arith.addf %63, %62 : vector<8x128xf32>
    %65 = arith.divf %63, %64 : vector<8x128xf32>
    %66 = arith.mulf %57, %36 : vector<8x128xf32>
    %67 = arith.mulf %51, %59 : vector<8x128xf32>
    %68 = arith.addf %66, %67 : vector<8x128xf32>
    %69 = math.tanh %68 : vector<8x128xf32>
    %70 = arith.mulf %65, %69 : vector<8x128xf32>
    %c1 = arith.constant 1 : index
    %c0_25 = arith.constant 0 : index
    %c0_26 = arith.constant 0 : index
    %71 = vector.load %arg5[%c1, %c0_25, %c0_26] : memref<9x8x128xf32, #tpu.memory_space<vmem>>, vector<1x8x128xf32>
    %72 = vector.shape_cast %71 : vector<1x8x128xf32> to vector<8x128xf32>
    %73 = vector.shape_cast %70 : vector<8x128xf32> to vector<1x8x128xf32>
    tpu.vector_store %arg5[%c1, %c0_25, %c0_26], %73 {strides = array<i32>} : memref<9x8x128xf32, #tpu.memory_space<vmem>>, vector<1x8x128xf32>,
    %c16 = arith.constant 16 : index
    %c0_27 = arith.constant 0 : index
    %74 = vector.load %arg6[%c16, %c0_27] : memref<72x512xf32, #tpu.memory_space<vmem>>, vector<8x512xf32>
    %75 = arith.truncf %70 : vector<8x128xf32> to vector<8x128xbf16>
    %cst_28 = arith.constant dense<0.000000e+00> : vector<8x512xf32>
    %76 = tpu.matmul %75, %7, %cst_28 {dimension_numbers = #tpu.dot_dimension_numbers<[1], [0], [0], [1], [0, 0, 1, 1], [], []>} : vector<8x128xbf16>, vector<128x512xbf16>, vector<8x512xf32> -> vector<8x512xf32>
    %77 = arith.addf %74, %76 : vector<8x512xf32>
    %78 = vector.extract_strided_slice %77 {offsets = [0, 0], sizes = [8, 128], strides = [1, 1]} : vector<8x512xf32> to vector<8x128xf32>
    %79 = arith.negf %78 : vector<8x128xf32>
    %80 = math.exp %79 : vector<8x128xf32>
    %cst_29 = arith.constant 1.000000e+00 : f32
    %81 = vector.broadcast %cst_29 : f32 to vector<8x128xf32>
    %82 = arith.addf %81, %80 : vector<8x128xf32>
    %83 = arith.divf %81, %82 : vector<8x128xf32>
    %84 = vector.extract_strided_slice %77 {offsets = [0, 128], sizes = [8, 128], strides = [1, 1]} : vector<8x512xf32> to vector<8x128xf32>
    %85 = arith.negf %84 : vector<8x128xf32>
    %86 = math.exp %85 : vector<8x128xf32>
    %cst_30 = arith.constant 1.000000e+00 : f32
    %87 = vector.broadcast %cst_30 : f32 to vector<8x128xf32>
    %88 = arith.addf %87, %86 : vector<8x128xf32>
    %89 = arith.divf %87, %88 : vector<8x128xf32>
    %90 = vector.extract_strided_slice %77 {offsets = [0, 256], sizes = [8, 128], strides = [1, 1]} : vector<8x512xf32> to vector<8x128xf32>
    %91 = math.tanh %90 : vector<8x128xf32>
    %92 = vector.extract_strided_slice %77 {offsets = [0, 384], sizes = [8, 128], strides = [1, 1]} : vector<8x512xf32> to vector<8x128xf32>
    %93 = arith.negf %92 : vector<8x128xf32>
    %94 = math.exp %93 : vector<8x128xf32>
    %cst_31 = arith.constant 1.000000e+00 : f32
    %95 = vector.broadcast %cst_31 : f32 to vector<8x128xf32>
    %96 = arith.addf %95, %94 : vector<8x128xf32>
    %97 = arith.divf %95, %96 : vector<8x128xf32>
    %98 = arith.mulf %89, %68 : vector<8x128xf32>
    %99 = arith.mulf %83, %91 : vector<8x128xf32>
    %100 = arith.addf %98, %99 : vector<8x128xf32>
    %101 = math.tanh %100 : vector<8x128xf32>
    %102 = arith.mulf %97, %101 : vector<8x128xf32>
    %c2 = arith.constant 2 : index
    %c0_32 = arith.constant 0 : index
    %c0_33 = arith.constant 0 : index
    %103 = vector.load %arg5[%c2, %c0_32, %c0_33] : memref<9x8x128xf32, #tpu.memory_space<vmem>>, vector<1x8x128xf32>
    %104 = vector.shape_cast %103 : vector<1x8x128xf32> to vector<8x128xf32>
    %105 = vector.shape_cast %102 : vector<8x128xf32> to vector<1x8x128xf32>
    tpu.vector_store %arg5[%c2, %c0_32, %c0_33], %105 {strides = array<i32>} : memref<9x8x128xf32, #tpu.memory_space<vmem>>, vector<1x8x128xf32>,
    %c24 = arith.constant 24 : index
    %c0_34 = arith.constant 0 : index
    %106 = vector.load %arg6[%c24, %c0_34] : memref<72x512xf32, #tpu.memory_space<vmem>>, vector<8x512xf32>
    %107 = arith.truncf %102 : vector<8x128xf32> to vector<8x128xbf16>
    %cst_35 = arith.constant dense<0.000000e+00> : vector<8x512xf32>
    %108 = tpu.matmul %107, %7, %cst_35 {dimension_numbers = #tpu.dot_dimension_numbers<[1], [0], [0], [1], [0, 0, 1, 1], [], []>} : vector<8x128xbf16>, vector<128x512xbf16>, vector<8x512xf32> -> vector<8x512xf32>
    %109 = arith.addf %106, %108 : vector<8x512xf32>
    %110 = vector.extract_strided_slice %109 {offsets = [0, 0], sizes = [8, 128], strides = [1, 1]} : vector<8x512xf32> to vector<8x128xf32>
    %111 = arith.negf %110 : vector<8x128xf32>
    %112 = math.exp %111 : vector<8x128xf32>
    %cst_36 = arith.constant 1.000000e+00 : f32
    %113 = vector.broadcast %cst_36 : f32 to vector<8x128xf32>
    %114 = arith.addf %113, %112 : vector<8x128xf32>
    %115 = arith.divf %113, %114 : vector<8x128xf32>
    %116 = vector.extract_strided_slice %109 {offsets = [0, 128], sizes = [8, 128], strides = [1, 1]} : vector<8x512xf32> to vector<8x128xf32>
    %117 = arith.negf %116 : vector<8x128xf32>
    %118 = math.exp %117 : vector<8x128xf32>
    %cst_37 = arith.constant 1.000000e+00 : f32
    %119 = vector.broadcast %cst_37 : f32 to vector<8x128xf32>
    %120 = arith.addf %119, %118 : vector<8x128xf32>
    %121 = arith.divf %119, %120 : vector<8x128xf32>
    %122 = vector.extract_strided_slice %109 {offsets = [0, 256], sizes = [8, 128], strides = [1, 1]} : vector<8x512xf32> to vector<8x128xf32>
    %123 = math.tanh %122 : vector<8x128xf32>
    %124 = vector.extract_strided_slice %109 {offsets = [0, 384], sizes = [8, 128], strides = [1, 1]} : vector<8x512xf32> to vector<8x128xf32>
    %125 = arith.negf %124 : vector<8x128xf32>
    %126 = math.exp %125 : vector<8x128xf32>
    %cst_38 = arith.constant 1.000000e+00 : f32
    %127 = vector.broadcast %cst_38 : f32 to vector<8x128xf32>
    %128 = arith.addf %127, %126 : vector<8x128xf32>
    %129 = arith.divf %127, %128 : vector<8x128xf32>
    %130 = arith.mulf %121, %100 : vector<8x128xf32>
    %131 = arith.mulf %115, %123 : vector<8x128xf32>
    %132 = arith.addf %130, %131 : vector<8x128xf32>
    %133 = math.tanh %132 : vector<8x128xf32>
    %134 = arith.mulf %129, %133 : vector<8x128xf32>
    %c3 = arith.constant 3 : index
    %c0_39 = arith.constant 0 : index
    %c0_40 = arith.constant 0 : index
    %135 = vector.load %arg5[%c3, %c0_39, %c0_40] : memref<9x8x128xf32, #tpu.memory_space<vmem>>, vector<1x8x128xf32>
    %136 = vector.shape_cast %135 : vector<1x8x128xf32> to vector<8x128xf32>
    %137 = vector.shape_cast %134 : vector<8x128xf32> to vector<1x8x128xf32>
    tpu.vector_store %arg5[%c3, %c0_39, %c0_40], %137 {strides = array<i32>} : memref<9x8x128xf32, #tpu.memory_space<vmem>>, vector<1x8x128xf32>,
    %c32 = arith.constant 32 : index
    %c0_41 = arith.constant 0 : index
    %138 = vector.load %arg6[%c32, %c0_41] : memref<72x512xf32, #tpu.memory_space<vmem>>, vector<8x512xf32>
    %139 = arith.truncf %134 : vector<8x128xf32> to vector<8x128xbf16>
    %cst_42 = arith.constant dense<0.000000e+00> : vector<8x512xf32>
    %140 = tpu.matmul %139, %7, %cst_42 {dimension_numbers = #tpu.dot_dimension_numbers<[1], [0], [0], [1], [0, 0, 1, 1], [], []>} : vector<8x128xbf16>, vector<128x512xbf16>, vector<8x512xf32> -> vector<8x512xf32>
    %141 = arith.addf %138, %140 : vector<8x512xf32>
    %142 = vector.extract_strided_slice %141 {offsets = [0, 0], sizes = [8, 128], strides = [1, 1]} : vector<8x512xf32> to vector<8x128xf32>
    %143 = arith.negf %142 : vector<8x128xf32>
    %144 = math.exp %143 : vector<8x128xf32>
    %cst_43 = arith.constant 1.000000e+00 : f32
    %145 = vector.broadcast %cst_43 : f32 to vector<8x128xf32>
    %146 = arith.addf %145, %144 : vector<8x128xf32>
    %147 = arith.divf %145, %146 : vector<8x128xf32>
    %148 = vector.extract_strided_slice %141 {offsets = [0, 128], sizes = [8, 128], strides = [1, 1]} : vector<8x512xf32> to vector<8x128xf32>
    %149 = arith.negf %148 : vector<8x128xf32>
    %150 = math.exp %149 : vector<8x128xf32>
    %cst_44 = arith.constant 1.000000e+00 : f32
    %151 = vector.broadcast %cst_44 : f32 to vector<8x128xf32>
    %152 = arith.addf %151, %150 : vector<8x128xf32>
    %153 = arith.divf %151, %152 : vector<8x128xf32>
    %154 = vector.extract_strided_slice %141 {offsets = [0, 256], sizes = [8, 128], strides = [1, 1]} : vector<8x512xf32> to vector<8x128xf32>
    %155 = math.tanh %154 : vector<8x128xf32>
    %156 = vector.extract_strided_slice %141 {offsets = [0, 384], sizes = [8, 128], strides = [1, 1]} : vector<8x512xf32> to vector<8x128xf32>
    %157 = arith.negf %156 : vector<8x128xf32>
    %158 = math.exp %157 : vector<8x128xf32>
    %cst_45 = arith.constant 1.000000e+00 : f32
    %159 = vector.broadcast %cst_45 : f32 to vector<8x128xf32>
    %160 = arith.addf %159, %158 : vector<8x128xf32>
    %161 = arith.divf %159, %160 : vector<8x128xf32>
    %162 = arith.mulf %153, %132 : vector<8x128xf32>
    %163 = arith.mulf %147, %155 : vector<8x128xf32>
    %164 = arith.addf %162, %163 : vector<8x128xf32>
    %165 = math.tanh %164 : vector<8x128xf32>
    %166 = arith.mulf %161, %165 : vector<8x128xf32>
    %c4 = arith.constant 4 : index
    %c0_46 = arith.constant 0 : index
    %c0_47 = arith.constant 0 : index
    %167 = vector.load %arg5[%c4, %c0_46, %c0_47] : memref<9x8x128xf32, #tpu.memory_space<vmem>>, vector<1x8x128xf32>
    %168 = vector.shape_cast %167 : vector<1x8x128xf32> to vector<8x128xf32>
    %169 = vector.shape_cast %166 : vector<8x128xf32> to vector<1x8x128xf32>
    tpu.vector_store %arg5[%c4, %c0_46, %c0_47], %169 {strides = array<i32>} : memref<9x8x128xf32, #tpu.memory_space<vmem>>, vector<1x8x128xf32>,
    %c40 = arith.constant 40 : index
    %c0_48 = arith.constant 0 : index
    %170 = vector.load %arg6[%c40, %c0_48] : memref<72x512xf32, #tpu.memory_space<vmem>>, vector<8x512xf32>
    %171 = arith.truncf %166 : vector<8x128xf32> to vector<8x128xbf16>
    %cst_49 = arith.constant dense<0.000000e+00> : vector<8x512xf32>
    %172 = tpu.matmul %171, %7, %cst_49 {dimension_numbers = #tpu.dot_dimension_numbers<[1], [0], [0], [1], [0, 0, 1, 1], [], []>} : vector<8x128xbf16>, vector<128x512xbf16>, vector<8x512xf32> -> vector<8x512xf32>
    %173 = arith.addf %170, %172 : vector<8x512xf32>
    %174 = vector.extract_strided_slice %173 {offsets = [0, 0], sizes = [8, 128], strides = [1, 1]} : vector<8x512xf32> to vector<8x128xf32>
    %175 = arith.negf %174 : vector<8x128xf32>
    %176 = math.exp %175 : vector<8x128xf32>
    %cst_50 = arith.constant 1.000000e+00 : f32
    %177 = vector.broadcast %cst_50 : f32 to vector<8x128xf32>
    %178 = arith.addf %177, %176 : vector<8x128xf32>
    %179 = arith.divf %177, %178 : vector<8x128xf32>
    %180 = vector.extract_strided_slice %173 {offsets = [0, 128], sizes = [8, 128], strides = [1, 1]} : vector<8x512xf32> to vector<8x128xf32>
    %181 = arith.negf %180 : vector<8x128xf32>
    %182 = math.exp %181 : vector<8x128xf32>
    %cst_51 = arith.constant 1.000000e+00 : f32
    %183 = vector.broadcast %cst_51 : f32 to vector<8x128xf32>
    %184 = arith.addf %183, %182 : vector<8x128xf32>
    %185 = arith.divf %183, %184 : vector<8x128xf32>
    %186 = vector.extract_strided_slice %173 {offsets = [0, 256], sizes = [8, 128], strides = [1, 1]} : vector<8x512xf32> to vector<8x128xf32>
    %187 = math.tanh %186 : vector<8x128xf32>
    %188 = vector.extract_strided_slice %173 {offsets = [0, 384], sizes = [8, 128], strides = [1, 1]} : vector<8x512xf32> to vector<8x128xf32>
    %189 = arith.negf %188 : vector<8x128xf32>
    %190 = math.exp %189 : vector<8x128xf32>
    %cst_52 = arith.constant 1.000000e+00 : f32
    %191 = vector.broadcast %cst_52 : f32 to vector<8x128xf32>
    %192 = arith.addf %191, %190 : vector<8x128xf32>
    %193 = arith.divf %191, %192 : vector<8x128xf32>
    %194 = arith.mulf %185, %164 : vector<8x128xf32>
    %195 = arith.mulf %179, %187 : vector<8x128xf32>
    %196 = arith.addf %194, %195 : vector<8x128xf32>
    %197 = math.tanh %196 : vector<8x128xf32>
    %198 = arith.mulf %193, %197 : vector<8x128xf32>
    %c5 = arith.constant 5 : index
    %c0_53 = arith.constant 0 : index
    %c0_54 = arith.constant 0 : index
    %199 = vector.load %arg5[%c5, %c0_53, %c0_54] : memref<9x8x128xf32, #tpu.memory_space<vmem>>, vector<1x8x128xf32>
    %200 = vector.shape_cast %199 : vector<1x8x128xf32> to vector<8x128xf32>
    %201 = vector.shape_cast %198 : vector<8x128xf32> to vector<1x8x128xf32>
    tpu.vector_store %arg5[%c5, %c0_53, %c0_54], %201 {strides = array<i32>} : memref<9x8x128xf32, #tpu.memory_space<vmem>>, vector<1x8x128xf32>,
    %c48 = arith.constant 48 : index
    %c0_55 = arith.constant 0 : index
    %202 = vector.load %arg6[%c48, %c0_55] : memref<72x512xf32, #tpu.memory_space<vmem>>, vector<8x512xf32>
    %203 = arith.truncf %198 : vector<8x128xf32> to vector<8x128xbf16>
    %cst_56 = arith.constant dense<0.000000e+00> : vector<8x512xf32>
    %204 = tpu.matmul %203, %7, %cst_56 {dimension_numbers = #tpu.dot_dimension_numbers<[1], [0], [0], [1], [0, 0, 1, 1], [], []>} : vector<8x128xbf16>, vector<128x512xbf16>, vector<8x512xf32> -> vector<8x512xf32>
    %205 = arith.addf %202, %204 : vector<8x512xf32>
    %206 = vector.extract_strided_slice %205 {offsets = [0, 0], sizes = [8, 128], strides = [1, 1]} : vector<8x512xf32> to vector<8x128xf32>
    %207 = arith.negf %206 : vector<8x128xf32>
    %208 = math.exp %207 : vector<8x128xf32>
    %cst_57 = arith.constant 1.000000e+00 : f32
    %209 = vector.broadcast %cst_57 : f32 to vector<8x128xf32>
    %210 = arith.addf %209, %208 : vector<8x128xf32>
    %211 = arith.divf %209, %210 : vector<8x128xf32>
    %212 = vector.extract_strided_slice %205 {offsets = [0, 128], sizes = [8, 128], strides = [1, 1]} : vector<8x512xf32> to vector<8x128xf32>
    %213 = arith.negf %212 : vector<8x128xf32>
    %214 = math.exp %213 : vector<8x128xf32>
    %cst_58 = arith.constant 1.000000e+00 : f32
    %215 = vector.broadcast %cst_58 : f32 to vector<8x128xf32>
    %216 = arith.addf %215, %214 : vector<8x128xf32>
    %217 = arith.divf %215, %216 : vector<8x128xf32>
    %218 = vector.extract_strided_slice %205 {offsets = [0, 256], sizes = [8, 128], strides = [1, 1]} : vector<8x512xf32> to vector<8x128xf32>
    %219 = math.tanh %218 : vector<8x128xf32>
    %220 = vector.extract_strided_slice %205 {offsets = [0, 384], sizes = [8, 128], strides = [1, 1]} : vector<8x512xf32> to vector<8x128xf32>
    %221 = arith.negf %220 : vector<8x128xf32>
    %222 = math.exp %221 : vector<8x128xf32>
    %cst_59 = arith.constant 1.000000e+00 : f32
    %223 = vector.broadcast %cst_59 : f32 to vector<8x128xf32>
    %224 = arith.addf %223, %222 : vector<8x128xf32>
    %225 = arith.divf %223, %224 : vector<8x128xf32>
    %226 = arith.mulf %217, %196 : vector<8x128xf32>
    %227 = arith.mulf %211, %219 : vector<8x128xf32>
    %228 = arith.addf %226, %227 : vector<8x128xf32>
    %229 = math.tanh %228 : vector<8x128xf32>
    %230 = arith.mulf %225, %229 : vector<8x128xf32>
    %c6 = arith.constant 6 : index
    %c0_60 = arith.constant 0 : index
    %c0_61 = arith.constant 0 : index
    %231 = vector.load %arg5[%c6, %c0_60, %c0_61] : memref<9x8x128xf32, #tpu.memory_space<vmem>>, vector<1x8x128xf32>
    %232 = vector.shape_cast %231 : vector<1x8x128xf32> to vector<8x128xf32>
    %233 = vector.shape_cast %230 : vector<8x128xf32> to vector<1x8x128xf32>
    tpu.vector_store %arg5[%c6, %c0_60, %c0_61], %233 {strides = array<i32>} : memref<9x8x128xf32, #tpu.memory_space<vmem>>, vector<1x8x128xf32>,
    %c56 = arith.constant 56 : index
    %c0_62 = arith.constant 0 : index
    %234 = vector.load %arg6[%c56, %c0_62] : memref<72x512xf32, #tpu.memory_space<vmem>>, vector<8x512xf32>
    %235 = arith.truncf %230 : vector<8x128xf32> to vector<8x128xbf16>
    %cst_63 = arith.constant dense<0.000000e+00> : vector<8x512xf32>
    %236 = tpu.matmul %235, %7, %cst_63 {dimension_numbers = #tpu.dot_dimension_numbers<[1], [0], [0], [1], [0, 0, 1, 1], [], []>} : vector<8x128xbf16>, vector<128x512xbf16>, vector<8x512xf32> -> vector<8x512xf32>
    %237 = arith.addf %234, %236 : vector<8x512xf32>
    %238 = vector.extract_strided_slice %237 {offsets = [0, 0], sizes = [8, 128], strides = [1, 1]} : vector<8x512xf32> to vector<8x128xf32>
    %239 = arith.negf %238 : vector<8x128xf32>
    %240 = math.exp %239 : vector<8x128xf32>
    %cst_64 = arith.constant 1.000000e+00 : f32
    %241 = vector.broadcast %cst_64 : f32 to vector<8x128xf32>
    %242 = arith.addf %241, %240 : vector<8x128xf32>
    %243 = arith.divf %241, %242 : vector<8x128xf32>
    %244 = vector.extract_strided_slice %237 {offsets = [0, 128], sizes = [8, 128], strides = [1, 1]} : vector<8x512xf32> to vector<8x128xf32>
    %245 = arith.negf %244 : vector<8x128xf32>
    %246 = math.exp %245 : vector<8x128xf32>
    %cst_65 = arith.constant 1.000000e+00 : f32
    %247 = vector.broadcast %cst_65 : f32 to vector<8x128xf32>
    %248 = arith.addf %247, %246 : vector<8x128xf32>
    %249 = arith.divf %247, %248 : vector<8x128xf32>
    %250 = vector.extract_strided_slice %237 {offsets = [0, 256], sizes = [8, 128], strides = [1, 1]} : vector<8x512xf32> to vector<8x128xf32>
    %251 = math.tanh %250 : vector<8x128xf32>
    %252 = vector.extract_strided_slice %237 {offsets = [0, 384], sizes = [8, 128], strides = [1, 1]} : vector<8x512xf32> to vector<8x128xf32>
    %253 = arith.negf %252 : vector<8x128xf32>
    %254 = math.exp %253 : vector<8x128xf32>
    %cst_66 = arith.constant 1.000000e+00 : f32
    %255 = vector.broadcast %cst_66 : f32 to vector<8x128xf32>
    %256 = arith.addf %255, %254 : vector<8x128xf32>
    %257 = arith.divf %255, %256 : vector<8x128xf32>
    %258 = arith.mulf %249, %228 : vector<8x128xf32>
    %259 = arith.mulf %243, %251 : vector<8x128xf32>
    %260 = arith.addf %258, %259 : vector<8x128xf32>
    %261 = math.tanh %260 : vector<8x128xf32>
    %262 = arith.mulf %257, %261 : vector<8x128xf32>
    %c7 = arith.constant 7 : index
    %c0_67 = arith.constant 0 : index
    %c0_68 = arith.constant 0 : index
    %263 = vector.load %arg5[%c7, %c0_67, %c0_68] : memref<9x8x128xf32, #tpu.memory_space<vmem>>, vector<1x8x128xf32>
    %264 = vector.shape_cast %263 : vector<1x8x128xf32> to vector<8x128xf32>
    %265 = vector.shape_cast %262 : vector<8x128xf32> to vector<1x8x128xf32>
    tpu.vector_store %arg5[%c7, %c0_67, %c0_68], %265 {strides = array<i32>} : memref<9x8x128xf32, #tpu.memory_space<vmem>>, vector<1x8x128xf32>,
    %c64 = arith.constant 64 : index
    %c0_69 = arith.constant 0 : index
    %266 = vector.load %arg6[%c64, %c0_69] : memref<72x512xf32, #tpu.memory_space<vmem>>, vector<8x512xf32>
    %267 = arith.truncf %262 : vector<8x128xf32> to vector<8x128xbf16>
    %cst_70 = arith.constant dense<0.000000e+00> : vector<8x512xf32>
    %268 = tpu.matmul %267, %7, %cst_70 {dimension_numbers = #tpu.dot_dimension_numbers<[1], [0], [0], [1], [0, 0, 1, 1], [], []>} : vector<8x128xbf16>, vector<128x512xbf16>, vector<8x512xf32> -> vector<8x512xf32>
    %269 = arith.addf %266, %268 : vector<8x512xf32>
    %270 = vector.extract_strided_slice %269 {offsets = [0, 0], sizes = [8, 128], strides = [1, 1]} : vector<8x512xf32> to vector<8x128xf32>
    %271 = arith.negf %270 : vector<8x128xf32>
    %272 = math.exp %271 : vector<8x128xf32>
    %cst_71 = arith.constant 1.000000e+00 : f32
    %273 = vector.broadcast %cst_71 : f32 to vector<8x128xf32>
    %274 = arith.addf %273, %272 : vector<8x128xf32>
    %275 = arith.divf %273, %274 : vector<8x128xf32>
    %276 = vector.extract_strided_slice %269 {offsets = [0, 128], sizes = [8, 128], strides = [1, 1]} : vector<8x512xf32> to vector<8x128xf32>
    %277 = arith.negf %276 : vector<8x128xf32>
    %278 = math.exp %277 : vector<8x128xf32>
    %cst_72 = arith.constant 1.000000e+00 : f32
    %279 = vector.broadcast %cst_72 : f32 to vector<8x128xf32>
    %280 = arith.addf %279, %278 : vector<8x128xf32>
    %281 = arith.divf %279, %280 : vector<8x128xf32>
    %282 = vector.extract_strided_slice %269 {offsets = [0, 256], sizes = [8, 128], strides = [1, 1]} : vector<8x512xf32> to vector<8x128xf32>
    %283 = math.tanh %282 : vector<8x128xf32>
    %284 = vector.extract_strided_slice %269 {offsets = [0, 384], sizes = [8, 128], strides = [1, 1]} : vector<8x512xf32> to vector<8x128xf32>
    %285 = arith.negf %284 : vector<8x128xf32>
    %286 = math.exp %285 : vector<8x128xf32>
    %cst_73 = arith.constant 1.000000e+00 : f32
    %287 = vector.broadcast %cst_73 : f32 to vector<8x128xf32>
    %288 = arith.addf %287, %286 : vector<8x128xf32>
    %289 = arith.divf %287, %288 : vector<8x128xf32>
    %290 = arith.mulf %281, %260 : vector<8x128xf32>
    %291 = arith.mulf %275, %283 : vector<8x128xf32>
    %292 = arith.addf %290, %291 : vector<8x128xf32>
    %293 = math.tanh %292 : vector<8x128xf32>
    %294 = arith.mulf %289, %293 : vector<8x128xf32>
    %c8_74 = arith.constant 8 : index
    %c0_75 = arith.constant 0 : index
    %c0_76 = arith.constant 0 : index
    %295 = vector.load %arg5[%c8_74, %c0_75, %c0_76] : memref<9x8x128xf32, #tpu.memory_space<vmem>>, vector<1x8x128xf32>
    %296 = vector.shape_cast %295 : vector<1x8x128xf32> to vector<8x128xf32>
    %297 = vector.shape_cast %294 : vector<8x128xf32> to vector<1x8x128xf32>
    tpu.vector_store %arg5[%c8_74, %c0_75, %c0_76], %297 {strides = array<i32>} : memref<9x8x128xf32, #tpu.memory_space<vmem>>, vector<1x8x128xf32>,
    return
  }
  func.func @transform_0(%arg0: i32) -> (i32, i32) {
    %c0_i32 = arith.constant 0 : i32
    %c0_i32_0 = arith.constant 0 : i32
    return %arg0, %c0_i32 : i32, i32
  }
  func.func @transform_1(%arg0: i32) -> (i32, i32) {
    %c0_i32 = arith.constant 0 : i32
    %c0_i32_0 = arith.constant 0 : i32
    %c0_i32_1 = arith.constant 0 : i32
    return %c0_i32, %c0_i32_0 : i32, i32
  }
  func.func @transform_2(%arg0: i32) -> (i32, i32) {
    %c0_i32 = arith.constant 0 : i32
    %c0_i32_0 = arith.constant 0 : i32
    %c0_i32_1 = arith.constant 0 : i32
    return %c0_i32, %c0_i32_0 : i32, i32
  }
  func.func @transform_3(%arg0: i32) -> (i32, i32) {
    %c0_i32 = arith.constant 0 : i32
    %c0_i32_0 = arith.constant 0 : i32
    %c0_i32_1 = arith.constant 0 : i32
    return %c0_i32, %c0_i32_0 : i32, i32
  }
  func.func @transform_4(%arg0: i32) -> (i32, i32, i32) {
    %c0_i32 = arith.constant 0 : i32
    %c0_i32_0 = arith.constant 0 : i32
    %c0_i32_1 = arith.constant 0 : i32
    return %c0_i32, %arg0, %c0_i32_0 : i32, i32, i32
  }
}

</mosaic_0001>

<llo_original>
// kernel: tpu_custom_call.1
$region0: #{tpu_custom_call.1}
  #allocation0 [shape = 'u32[]', space=smem, size = 0x4, offset = 0x4, fixed_abs, tag = 'smem constant byte address 0x4 - core index']
  #allocation1 [shape = 'u32[144,128]{1,0:T(1,128)}', space=vmem, size = 0x12000, scoped, tag = 'internal scratch']
  #allocation2 [shape = 'f32[72,512]{1,0:T(8,128)}', space=vmem, size = 0x24000, scoped, tag = 'scratch operand']
  %s0 = inlined_call_operand.vmem [shape: bf16[72,32], index: 0, kind: input, shape index: {}]
  %s1 = inlined_call_operand.hbm [shape: bf16[32,512], index: 1, kind: input, shape index: {}]
  %s2 = inlined_call_operand.hbm [shape: bf16[128,512], index: 2, kind: input, shape index: {}]
  %s3 = inlined_call_operand.vmem [shape: f32[1,512], index: 3, kind: input, shape index: {}]
  %s4 = inlined_call_operand.hbm [shape: f32[9,8,128], index: 4, kind: output, shape index: {}]
  %s5 = sld [smem:[#allocation0]]
  $region34: #{tpu_custom_call.1} parent=0
    _
  %s7 = ssub.s32 1, %s5
  %s8 = scalar_select 0, %s7, %s5
  $region1: #{tpu_custom_call.1} parent=0
    #allocation3 [shape = 'u8[32768]{0}', space=vmem, size = 0x8000, scoped, tag = 'input window, operand 1, single buffered']
    #allocation4 [shape = 's32[1]{0}', space=sflag, size = 0x4, scoped, tag = 'scoped memory for tpu_custom_call.1']
    #allocation5 [shape = 's32[1]{0}', space=sflag, size = 0x4, scoped, tag = 'scoped memory for tpu_custom_call.1']
    #allocation6 [shape = 'u8[131072]{0}', space=vmem, size = 0x20000, scoped, tag = 'input window, operand 2, single buffered']
    #allocation7 [shape = 's32[1]{0}', space=sflag, size = 0x4, scoped, tag = 'scoped memory for tpu_custom_call.1']
    #allocation8 [shape = 'u8[36864]{0}', space=vmem, size = 0x9000, scoped, tag = 'output window, operand 0, single buffered']
    %9 = vsyncpa [#allocation4], 0
    %10 = vsyncpa [#allocation7], 0
    %11 = vsyncpa [#allocation5], 0
    // Predicated region
    $region2: #{tpu_custom_call.1} parent=1 // pred_check
      _
    $region3: #{tpu_custom_call.1} parent=1 // pred_check_branch
      %13 = sbr.rel (0) target = $region5
    $region4: #{tpu_custom_call.1} parent=1 // pred_region
      _
    $region5: #{tpu_custom_call.1} parent=1 // pred_fallthru
      _
    // Predicated region
    $region6: #{tpu_custom_call.1} parent=1 // pred_check
      _
    $region7: #{tpu_custom_call.1} parent=1 // pred_check_branch
      %15 = sbr.rel (0) target = $region9
    $region8: #{tpu_custom_call.1} parent=1 // pred_region
      %s17 = ssub.s32 1024, 1024
      %18 = vsyncadd [#allocation4], %s17
      %s19 = sshll.u32 [#allocation3], 4
      %s20 = int_to_ptr.vmem [resolvable:$true] %s19
      %25 = dma.hbm_to_vmem [thread:$0]  %s1, 1024, %s20, [#allocation4], 256, 256, 16
    $region9: #{tpu_custom_call.1} parent=1 // pred_fallthru
      _
    // Predicated region
    $region10: #{tpu_custom_call.1} parent=1 // pred_check
      _
    $region11: #{tpu_custom_call.1} parent=1 // pred_check_branch
      %27 = sbr.rel (0) target = $region13
    $region12: #{tpu_custom_call.1} parent=1 // pred_region
      %s29 = ssub.s32 4096, 4096
      %30 = vsyncadd [#allocation7], %s29
      %s31 = sshll.u32 [#allocation6], 4
      %s32 = int_to_ptr.vmem [resolvable:$true] %s31
      %37 = dma.hbm_to_vmem [thread:$0]  %s2, 4096, %s32, [#allocation7], 256, 256, 16
    $region13: #{tpu_custom_call.1} parent=1 // pred_fallthru
      _
    // Predicated region
    $region14: #{tpu_custom_call.1} parent=1 // pred_check
      _
    $region15: #{tpu_custom_call.1} parent=1 // pred_check_branch
      %39 = sbr.rel (0) target = $region17
    $region16: #{tpu_custom_call.1} parent=1 // pred_region
      _
    $region17: #{tpu_custom_call.1} parent=1 // pred_fallthru
      _
    // Predicated region
    $region18: #{tpu_custom_call.1} parent=1 // pred_check
      _
    $region19: #{tpu_custom_call.1} parent=1 // pred_check_branch
      %41 = sbr.rel (0) target = $region21
    $region20: #{tpu_custom_call.1} parent=1 // pred_region
      %42 = dma.done [#allocation4], 1024
    $region21: #{tpu_custom_call.1} parent=1 // pred_fallthru
      _
    // Predicated region
    $region22: #{tpu_custom_call.1} parent=1 // pred_check
      _
    $region23: #{tpu_custom_call.1} parent=1 // pred_check_branch
      %44 = sbr.rel (0) target = $region25
    $region24: #{tpu_custom_call.1} parent=1 // pred_region
      %45 = dma.done [#allocation7], 4096
    $region25: #{tpu_custom_call.1} parent=1 // pred_fallthru
      _
    %v47 = vld [vmem:[%s0] sm:$0xf]
    %v48 = vld [vmem:[%s0 + $0x4] sm:$0xf]
    %v49 = vld [vmem:[%s0 + $0x8] sm:$0xf]
    %v50 = vld [vmem:[%s0 + $0xc] sm:$0xf]
    %v51 = vld [vmem:[%s0 + $0x10] sm:$0xf]
    %v52 = vld [vmem:[%s0 + $0x14] sm:$0xf]
    %v53 = vld [vmem:[%s0 + $0x18] sm:$0xf]
    %v54 = vld [vmem:[%s0 + $0x1c] sm:$0xf]
    %v55 = vld [vmem:[%s0 + $0x20] sm:$0xf]
    %v56 = vld [vmem:[#allocation3] sm:$0xff]
    %v57 = vld [vmem:[#allocation3 + $0x8] sm:$0xff]
    %v58 = vld [vmem:[#allocation3 + $0x10] sm:$0xff]
    %v59 = vld [vmem:[#allocation3 + $0x18] sm:$0xff]
    %v60 = vld [vmem:[#allocation3 + $0x20] sm:$0xff]
    %v61 = vld [vmem:[#allocation3 + $0x28] sm:$0xff]
    %v62 = vld [vmem:[#allocation3 + $0x30] sm:$0xff]
    %v63 = vld [vmem:[#allocation3 + $0x38] sm:$0xff]
    %v64 = vld [vmem:[%s3] sm:$0xf]
    %v66 = vlaneseq
    %v67 = vshrl.u32 %v66, 7
    %v68 = vsub.s32 0, %v67
    %v69 = vrot.slane %v64, %v68
    %v70 = vlaneseq
    %v71 = vshrl.u32 %v70, 7
    %v72 = vsub.s32 1, %v71
    %v73 = vrot.slane %v64, %v72
    %v74 = vlaneseq
    %v75 = vshrl.u32 %v74, 7
    %v76 = vsub.s32 2, %v75
    %v77 = vrot.slane %v64, %v76
    %v78 = vlaneseq
    %v79 = vshrl.u32 %v78, 7
    %v80 = vsub.s32 3, %v79
    %v81 = vrot.slane %v64, %v80
    %v95 = vunpack.c.l.b16 %v47
    %v96 = vunpack.c.l.b16 %v48
    %v97 = vunpack.c.l.b16 %v49
    %v98 = vunpack.c.l.b16 %v50
    %v99 = vunpack.c.l.b16 %v51
    %v100 = vunpack.c.l.b16 %v52
    %v101 = vunpack.c.l.b16 %v53
    %v102 = vunpack.c.l.b16 %v54
    %v103 = vunpack.c.l.b16 %v55
    %v104 = vpack.c.b16 %v96, %v95
    %v105 = vpack.c.b16 %v98, %v97
    %v106 = vpack.c.b16 %v100, %v99
    %v107 = vpack.c.b16 %v102, %v101
    %v108 = vpack.c.b16 %v103, %v103
    %v117 = vunpack.c.l.b16 %v56
    %v118 = vunpack.c.h.b16 %v56
    %v119 = vunpack.c.l.b16 %v57
    %v120 = vunpack.c.h.b16 %v57
    %v121 = vunpack.c.l.b16 %v58
    %v122 = vunpack.c.h.b16 %v58
    %v123 = vunpack.c.l.b16 %v59
    %v124 = vunpack.c.h.b16 %v59
    %v125 = vunpack.c.l.b16 %v60
    %v126 = vunpack.c.h.b16 %v60
    %v127 = vunpack.c.l.b16 %v61
    %v128 = vunpack.c.h.b16 %v61
    %v129 = vunpack.c.l.b16 %v62
    %v130 = vunpack.c.h.b16 %v62
    %v131 = vunpack.c.l.b16 %v63
    %v132 = vunpack.c.h.b16 %v63
    %v133 = vpack.c.b16 %v121, %v117
    %v134 = vpack.c.b16 %v122, %v118
    %v135 = vpack.c.b16 %v123, %v119
    %v136 = vpack.c.b16 %v124, %v120
    %v137 = vpack.c.b16 %v129, %v125
    %v138 = vpack.c.b16 %v130, %v126
    %v139 = vpack.c.b16 %v131, %v127
    %v140 = vpack.c.b16 %v132, %v128
    %vm149 = vcmask 261120
    %v151 = vsel %vm149, %v104, 0
    %v154 = vsel %vm149, %v105, 0
    %v157 = vsel %vm149, %v106, 0
    %v160 = vsel %vm149, %v107, 0
    %v163 = vsel %vm149, %v108, 0
    %165 = vmatprep.subr.bf16.mxu0 0
    %166 = vmatpush1.bf16.msra.mxu0 0
    %167 = vmatprep.subr.bf16.mxu0 0
    %168 = vmatpush1.bf16.msra.mxu0 0
    %169 = vmatprep.subr.bf16.mxu0 0
    %170 = vmatpush1.bf16.msra.mxu0 0
    %171 = vmatprep.subr.bf16.mxu0 0
    %172 = vmatpush1.bf16.msra.mxu0 0
    %173 = vmatprep.subr.bf16.mxu0 0
    %174 = vmatpush1.bf16.msra.mxu0 0
    %175 = vmatprep.subr.bf16.mxu0 0
    %176 = vmatpush1.bf16.msra.mxu0 0
    %177 = vmatprep.subr.bf16.mxu0 %v138
    %178 = vmatpush1.bf16.msra.mxu0 %v137
    %179 = vmatprep.subr.bf16.mxu0 %v134
    %180 = vmatpush1.bf16.msra.mxu0 %v133
    %181 = vmatprep.subr.bf16.mxu0 0
    %182 = vmatpush2.bf16.msra.mxu0 0
    %183 = vmatprep.subr.bf16.mxu0 0
    %184 = vmatpush2.bf16.msra.mxu0 0
    %185 = vmatprep.subr.bf16.mxu0 0
    %186 = vmatpush2.bf16.msra.mxu0 0
    %187 = vmatprep.subr.bf16.mxu0 0
    %188 = vmatpush2.bf16.msra.mxu0 0
    %189 = vmatprep.subr.bf16.mxu0 0
    %190 = vmatpush2.bf16.msra.mxu0 0
    %191 = vmatprep.subr.bf16.mxu0 0
    %192 = vmatpush2.bf16.msra.mxu0 0
    %193 = vmatprep.subr.bf16.mxu0 0
    %194 = vmatpush2.bf16.msra.mxu0 0
    %195 = vmatprep.subr.bf16.mxu0 0
    %196 = vmatpush2.bf16.msra.mxu0 0
    %197 = vmatprep.mubr.bf16.mxu0 0
    %198 = vmatmul.mubr.bf16.gmra.mxu0 %v151
    %v199 = vpop.f32.mrf.mxu0
    %v200 = vadd.f32 %v69, %v199
    %v201 = vpop.f32.mrf.mxu0
    %v202 = vadd.f32 %v73, %v201
    %v203 = vpop.f32.mrf.mxu0
    %v204 = vadd.f32 %v69, %v203
    %v205 = vpop.f32.mrf.mxu0
    %v206 = vadd.f32 %v73, %v205
    %207 = vmatprep.mubr.bf16.mxu0 0
    %208 = vmatmul.mubr.bf16.gmra.mxu0 %v154
    %v209 = vpop.f32.mrf.mxu0
    %v210 = vadd.f32 %v69, %v209
    %v211 = vpop.f32.mrf.mxu0
    %v212 = vadd.f32 %v73, %v211
    %v213 = vpop.f32.mrf.mxu0
    %v214 = vadd.f32 %v69, %v213
    %v215 = vpop.f32.mrf.mxu0
    %v216 = vadd.f32 %v73, %v215
    %217 = vmatprep.mubr.bf16.mxu0 0
    %218 = vmatmul.mubr.bf16.gmra.mxu0 %v157
    %v219 = vpop.f32.mrf.mxu0
    %v220 = vadd.f32 %v69, %v219
    %v221 = vpop.f32.mrf.mxu0
    %v222 = vadd.f32 %v73, %v221
    %v223 = vpop.f32.mrf.mxu0
    %v224 = vadd.f32 %v69, %v223
    %v225 = vpop.f32.mrf.mxu0
    %v226 = vadd.f32 %v73, %v225
    %227 = vmatprep.mubr.bf16.mxu0 0
    %228 = vmatmul.mubr.bf16.gmra.mxu0 %v160
    %v229 = vpop.f32.mrf.mxu0
    %v230 = vadd.f32 %v69, %v229
    %v231 = vpop.f32.mrf.mxu0
    %v232 = vadd.f32 %v73, %v231
    %v233 = vpop.f32.mrf.mxu0
    %v234 = vadd.f32 %v69, %v233
    %v235 = vpop.f32.mrf.mxu0
    %v236 = vadd.f32 %v73, %v235
    %237 = vmatprep.mubr.bf16.mxu0 0
    %238 = vmatmul.mubr.bf16.gmra.mxu0 %v163
    %v239 = vpop.f32.mrf.mxu0
    %v240 = vadd.f32 %v69, %v239
    %v241 = vpop.f32.mrf.mxu0
    %v242 = vadd.f32 %v73, %v241
    %v243 = vpop.f32.mrf.mxu0
    %v244 = vpop.f32.mrf.mxu0
    %245 = vdwg.mxu0
    %246 = vmatprep.subr.bf16.mxu0 0
    %247 = vmatpush1.bf16.msra.mxu0 0
    %248 = vmatprep.subr.bf16.mxu0 0
    %249 = vmatpush1.bf16.msra.mxu0 0
    %250 = vmatprep.subr.bf16.mxu0 0
    %251 = vmatpush1.bf16.msra.mxu0 0
    %252 = vmatprep.subr.bf16.mxu0 0
    %253 = vmatpush1.bf16.msra.mxu0 0
    %254 = vmatprep.subr.bf16.mxu0 0
    %255 = vmatpush1.bf16.msra.mxu0 0
    %256 = vmatprep.subr.bf16.mxu0 0
    %257 = vmatpush1.bf16.msra.mxu0 0
    %258 = vmatprep.subr.bf16.mxu0 %v140
    %259 = vmatpush1.bf16.msra.mxu0 %v139
    %260 = vmatprep.subr.bf16.mxu0 %v136
    %261 = vmatpush1.bf16.msra.mxu0 %v135
    %262 = vmatprep.subr.bf16.mxu0 0
    %263 = vmatpush2.bf16.msra.mxu0 0
    %264 = vmatprep.subr.bf16.mxu0 0
    %265 = vmatpush2.bf16.msra.mxu0 0
    %266 = vmatprep.subr.bf16.mxu0 0
    %267 = vmatpush2.bf16.msra.mxu0 0
    %268 = vmatprep.subr.bf16.mxu0 0
    %269 = vmatpush2.bf16.msra.mxu0 0
    %270 = vmatprep.subr.bf16.mxu0 0
    %271 = vmatpush2.bf16.msra.mxu0 0
    %272 = vmatprep.subr.bf16.mxu0 0
    %273 = vmatpush2.bf16.msra.mxu0 0
    %274 = vmatprep.subr.bf16.mxu0 0
    %275 = vmatpush2.bf16.msra.mxu0 0
    %276 = vmatprep.subr.bf16.mxu0 0
    %277 = vmatpush2.bf16.msra.mxu0 0
    %278 = vmatprep.mubr.bf16.mxu0 0
    %279 = vmatmul.mubr.bf16.gmra.mxu0 %v151
    %v280 = vpop.f32.mrf.mxu0
    %v281 = vadd.f32 %v77, %v280
    %v282 = vpop.f32.mrf.mxu0
    %v283 = vadd.f32 %v81, %v282
    %v284 = vpop.f32.mrf.mxu0
    %v285 = vadd.f32 %v77, %v284
    %v286 = vpop.f32.mrf.mxu0
    %v287 = vadd.f32 %v81, %v286
    %288 = vmatprep.mubr.bf16.mxu0 0
    %289 = vmatmul.mubr.bf16.gmra.mxu0 %v154
    %v290 = vpop.f32.mrf.mxu0
    %v291 = vadd.f32 %v77, %v290
    %v292 = vpop.f32.mrf.mxu0
    %v293 = vadd.f32 %v81, %v292
    %v294 = vpop.f32.mrf.mxu0
    %v295 = vadd.f32 %v77, %v294
    %v296 = vpop.f32.mrf.mxu0
    %v297 = vadd.f32 %v81, %v296
    %298 = vmatprep.mubr.bf16.mxu0 0
    %299 = vmatmul.mubr.bf16.gmra.mxu0 %v157
    %v300 = vpop.f32.mrf.mxu0
    %v301 = vadd.f32 %v77, %v300
    %v302 = vpop.f32.mrf.mxu0
    %v303 = vadd.f32 %v81, %v302
    %v304 = vpop.f32.mrf.mxu0
    %v305 = vadd.f32 %v77, %v304
    %v306 = vpop.f32.mrf.mxu0
    %v307 = vadd.f32 %v81, %v306
    %308 = vmatprep.mubr.bf16.mxu0 0
    %309 = vmatmul.mubr.bf16.gmra.mxu0 %v160
    %v310 = vpop.f32.mrf.mxu0
    %v311 = vadd.f32 %v77, %v310
    %v312 = vpop.f32.mrf.mxu0
    %v313 = vadd.f32 %v81, %v312
    %v314 = vpop.f32.mrf.mxu0
    %v315 = vadd.f32 %v77, %v314
    %v316 = vpop.f32.mrf.mxu0
    %v317 = vadd.f32 %v81, %v316
    %318 = vmatprep.mubr.bf16.mxu0 0
    %319 = vmatmul.mubr.bf16.gmra.mxu0 %v163
    %v320 = vpop.f32.mrf.mxu0
    %v321 = vadd.f32 %v77, %v320
    %v322 = vpop.f32.mrf.mxu0
    %v323 = vadd.f32 %v81, %v322
    %v324 = vpop.f32.mrf.mxu0
    %v325 = vpop.f32.mrf.mxu0
    %326 = vdwg.mxu0
    %327 = vst [vmem:[#allocation2] sm:$0xff] %v200
    %328 = vst [vmem:[#allocation2 + $0x8] sm:$0xff] %v202
    %329 = vst [vmem:[#allocation2 + $0x10] sm:$0xff] %v281
    %330 = vst [vmem:[#allocation2 + $0x18] sm:$0xff] %v283
    %331 = vst [vmem:[#allocation2 + $0x20] sm:$0xff] %v204
    %332 = vst [vmem:[#allocation2 + $0x28] sm:$0xff] %v206
    %333 = vst [vmem:[#allocation2 + $0x30] sm:$0xff] %v285
    %334 = vst [vmem:[#allocation2 + $0x38] sm:$0xff] %v287
    %335 = vst [vmem:[#allocation2 + $0x40] sm:$0xff] %v210
    %336 = vst [vmem:[#allocation2 + $0x48] sm:$0xff] %v212
    %337 = vst [vmem:[#allocation2 + $0x50] sm:$0xff] %v291
    %338 = vst [vmem:[#allocation2 + $0x58] sm:$0xff] %v293
    %339 = vst [vmem:[#allocation2 + $0x60] sm:$0xff] %v214
    %340 = vst [vmem:[#allocation2 + $0x68] sm:$0xff] %v216
    %341 = vst [vmem:[#allocation2 + $0x70] sm:$0xff] %v295
    %342 = vst [vmem:[#allocation2 + $0x78] sm:$0xff] %v297
    %343 = vst [vmem:[#allocation2 + $0x80] sm:$0xff] %v220
    %344 = vst [vmem:[#allocation2 + $0x88] sm:$0xff] %v222
    %345 = vst [vmem:[#allocation2 + $0x90] sm:$0xff] %v301
    %346 = vst [vmem:[#allocation2 + $0x98] sm:$0xff] %v303
    %347 = vst [vmem:[#allocation2 + $0xa0] sm:$0xff] %v224
    %348 = vst [vmem:[#allocation2 + $0xa8] sm:$0xff] %v226
    %349 = vst [vmem:[#allocation2 + $0xb0] sm:$0xff] %v305
    %350 = vst [vmem:[#allocation2 + $0xb8] sm:$0xff] %v307
    %351 = vst [vmem:[#allocation2 + $0xc0] sm:$0xff] %v230
    %352 = vst [vmem:[#allocation2 + $0xc8] sm:$0xff] %v232
    %353 = vst [vmem:[#allocation2 + $0xd0] sm:$0xff] %v311
    %354 = vst [vmem:[#allocation2 + $0xd8] sm:$0xff] %v313
    %355 = vst [vmem:[#allocation2 + $0xe0] sm:$0xff] %v234
    %356 = vst [vmem:[#allocation2 + $0xe8] sm:$0xff] %v236
    %357 = vst [vmem:[#allocation2 + $0xf0] sm:$0xff] %v315
    %358 = vst [vmem:[#allocation2 + $0xf8] sm:$0xff] %v317
    %359 = vst [vmem:[#allocation2 + $0x100] sm:$0xff] %v240
    %360 = vst [vmem:[#allocation2 + $0x108] sm:$0xff] %v242
    %361 = vst [vmem:[#allocation2 + $0x110] sm:$0xff] %v321
    %362 = vst [vmem:[#allocation2 + $0x118] sm:$0xff] %v323
    %v363 = vld [vmem:[#allocation6] sm:$0xff]
    %v364 = vld [vmem:[#allocation6 + $0x8] sm:$0xff]
    %v365 = vld [vmem:[#allocation6 + $0x10] sm:$0xff]
    %v366 = vld [vmem:[#allocation6 + $0x18] sm:$0xff]
    %v367 = vld [vmem:[#allocation6 + $0x20] sm:$0xff]
    %v368 = vld [vmem:[#allocation6 + $0x28] sm:$0xff]
    %v369 = vld [vmem:[#allocation6 + $0x30] sm:$0xff]
    %v370 = vld [vmem:[#allocation6 + $0x38] sm:$0xff]
    %v371 = vld [vmem:[#allocation6 + $0x40] sm:$0xff]
    %v372 = vld [vmem:[#allocation6 + $0x48] sm:$0xff]
    %v373 = vld [vmem:[#allocation6 + $0x50] sm:$0xff]
    %v374 = vld [vmem:[#allocation6 + $0x58] sm:$0xff]
    %v375 = vld [vmem:[#allocation6 + $0x60] sm:$0xff]
    %v376 = vld [vmem:[#allocation6 + $0x68] sm:$0xff]
    %v377 = vld [vmem:[#allocation6 + $0x70] sm:$0xff]
    %v378 = vld [vmem:[#allocation6 + $0x78] sm:$0xff]
    %v379 = vld [vmem:[#allocation6 + $0x80] sm:$0xff]
    %v380 = vld [vmem:[#allocation6 + $0x88] sm:$0xff]
    %v381 = vld [vmem:[#allocation6 + $0x90] sm:$0xff]
    %v382 = vld [vmem:[#allocation6 + $0x98] sm:$0xff]
    %v383 = vld [vmem:[#allocation6 + $0xa0] sm:$0xff]
    %v384 = vld [vmem:[#allocation6 + $0xa8] sm:$0xff]
    %v385 = vld [vmem:[#allocation6 + $0xb0] sm:$0xff]
    %v386 = vld [vmem:[#allocation6 + $0xb8] sm:$0xff]
    %v387 = vld [vmem:[#allocation6 + $0xc0] sm:$0xff]
    %v388 = vld [vmem:[#allocation6 + $0xc8] sm:$0xff]
    %v389 = vld [vmem:[#allocation6 + $0xd0] sm:$0xff]
    %v390 = vld [vmem:[#allocation6 + $0xd8] sm:$0xff]
    %v391 = vld [vmem:[#allocation6 + $0xe0] sm:$0xff]
    %v392 = vld [vmem:[#allocation6 + $0xe8] sm:$0xff]
    %v393 = vld [vmem:[#allocation6 + $0xf0] sm:$0xff]
    %v394 = vld [vmem:[#allocation6 + $0xf8] sm:$0xff]
    %v395 = vld [vmem:[#allocation2] sm:$0xff]
    %v396 = vld [vmem:[#allocation2 + $0x8] sm:$0xff]
    %v397 = vld [vmem:[#allocation2 + $0x10] sm:$0xff]
    %v398 = vld [vmem:[#allocation2 + $0x18] sm:$0xff]
    %v431 = vunpack.c.l.b16 %v363
    %v432 = vunpack.c.h.b16 %v363
    %v433 = vunpack.c.l.b16 %v364
    %v434 = vunpack.c.h.b16 %v364
    %v435 = vunpack.c.l.b16 %v365
    %v436 = vunpack.c.h.b16 %v365
    %v437 = vunpack.c.l.b16 %v366
    %v438 = vunpack.c.h.b16 %v366
    %v439 = vunpack.c.l.b16 %v367
    %v440 = vunpack.c.h.b16 %v367
    %v441 = vunpack.c.l.b16 %v368
    %v442 = vunpack.c.h.b16 %v368
    %v443 = vunpack.c.l.b16 %v369
    %v444 = vunpack.c.h.b16 %v369
    %v445 = vunpack.c.l.b16 %v370
    %v446 = vunpack.c.h.b16 %v370
    %v447 = vunpack.c.l.b16 %v371
    %v448 = vunpack.c.h.b16 %v371
    %v449 = vunpack.c.l.b16 %v372
    %v450 = vunpack.c.h.b16 %v372
    %v451 = vunpack.c.l.b16 %v373
    %v452 = vunpack.c.h.b16 %v373
    %v453 = vunpack.c.l.b16 %v374
    %v454 = vunpack.c.h.b16 %v374
    %v455 = vunpack.c.l.b16 %v375
    %v456 = vunpack.c.h.b16 %v375
    %v457 = vunpack.c.l.b16 %v376
    %v458 = vunpack.c.h.b16 %v376
    %v459 = vunpack.c.l.b16 %v377
    %v460 = vunpack.c.h.b16 %v377
    %v461 = vunpack.c.l.b16 %v378
    %v462 = vunpack.c.h.b16 %v378
    %v463 = vunpack.c.l.b16 %v379
    %v464 = vunpack.c.h.b16 %v379
    %v465 = vunpack.c.l.b16 %v380
    %v466 = vunpack.c.h.b16 %v380
    %v467 = vunpack.c.l.b16 %v381
    %v468 = vunpack.c.h.b16 %v381
    %v469 = vunpack.c.l.b16 %v382
    %v470 = vunpack.c.h.b16 %v382
    %v471 = vunpack.c.l.b16 %v383
    %v472 = vunpack.c.h.b16 %v383
    %v473 = vunpack.c.l.b16 %v384
    %v474 = vunpack.c.h.b16 %v384
    %v475 = vunpack.c.l.b16 %v385
    %v476 = vunpack.c.h.b16 %v385
    %v477 = vunpack.c.l.b16 %v386
    %v478 = vunpack.c.h.b16 %v386
    %v479 = vunpack.c.l.b16 %v387
    %v480 = vunpack.c.h.b16 %v387
    %v481 = vunpack.c.l.b16 %v388
    %v482 = vunpack.c.h.b16 %v388
    %v483 = vunpack.c.l.b16 %v389
    %v484 = vunpack.c.h.b16 %v389
    %v485 = vunpack.c.l.b16 %v390
    %v486 = vunpack.c.h.b16 %v390
    %v487 = vunpack.c.l.b16 %v391
    %v488 = vunpack.c.h.b16 %v391
    %v489 = vunpack.c.l.b16 %v392
    %v490 = vunpack.c.h.b16 %v392
    %v491 = vunpack.c.l.b16 %v393
    %v492 = vunpack.c.h.b16 %v393
    %v493 = vunpack.c.l.b16 %v394
    %v494 = vunpack.c.h.b16 %v394
    %v495 = vpack.c.b16 %v435, %v431
    %v496 = vpack.c.b16 %v436, %v432
    %v497 = vpack.c.b16 %v437, %v433
    %v498 = vpack.c.b16 %v438, %v434
    %v499 = vpack.c.b16 %v443, %v439
    %v500 = vpack.c.b16 %v444, %v440
    %v501 = vpack.c.b16 %v445, %v441
    %v502 = vpack.c.b16 %v446, %v442
    %v503 = vpack.c.b16 %v451, %v447
    %v504 = vpack.c.b16 %v452, %v448
    %v505 = vpack.c.b16 %v453, %v449
    %v506 = vpack.c.b16 %v454, %v450
    %v507 = vpack.c.b16 %v459, %v455
    %v508 = vpack.c.b16 %v460, %v456
    %v509 = vpack.c.b16 %v461, %v457
    %v510 = vpack.c.b16 %v462, %v458
    %v511 = vpack.c.b16 %v467, %v463
    %v512 = vpack.c.b16 %v468, %v464
    %v513 = vpack.c.b16 %v469, %v465
    %v514 = vpack.c.b16 %v470, %v466
    %v515 = vpack.c.b16 %v475, %v471
    %v516 = vpack.c.b16 %v476, %v472
    %v517 = vpack.c.b16 %v477, %v473
    %v518 = vpack.c.b16 %v478, %v474
    %v519 = vpack.c.b16 %v483, %v479
    %v520 = vpack.c.b16 %v484, %v480
    %v521 = vpack.c.b16 %v485, %v481
    %v522 = vpack.c.b16 %v486, %v482
    %v523 = vpack.c.b16 %v491, %v487
    %v524 = vpack.c.b16 %v492, %v488
    %v525 = vpack.c.b16 %v493, %v489
    %v526 = vpack.c.b16 %v494, %v490
    %559 = vmatprep.subr.bf16.mxu0 %v524
    %560 = vmatpush1.bf16.msra.mxu0 %v523
    %561 = vmatprep.subr.bf16.mxu0 %v520
    %562 = vmatpush1.bf16.msra.mxu0 %v519
    %563 = vmatprep.subr.bf16.mxu0 %v516
    %564 = vmatpush1.bf16.msra.mxu0 %v515
    %565 = vmatprep.subr.bf16.mxu0 %v512
    %566 = vmatpush1.bf16.msra.mxu0 %v511
    %567 = vmatprep.subr.bf16.mxu0 %v508
    %568 = vmatpush1.bf16.msra.mxu0 %v507
    %569 = vmatprep.subr.bf16.mxu0 %v504
    %570 = vmatpush1.bf16.msra.mxu0 %v503
    %571 = vmatprep.subr.bf16.mxu0 %v500
    %572 = vmatpush1.bf16.msra.mxu0 %v499
    %573 = vmatprep.subr.bf16.mxu0 %v496
    %574 = vmatpush1.bf16.msra.mxu0 %v495
    %575 = vmatprep.subr.bf16.mxu0 0
    %576 = vmatpush2.bf16.msra.mxu0 0
    %577 = vmatprep.subr.bf16.mxu0 0
    %578 = vmatpush2.bf16.msra.mxu0 0
    %579 = vmatprep.subr.bf16.mxu0 0
    %580 = vmatpush2.bf16.msra.mxu0 0
    %581 = vmatprep.subr.bf16.mxu0 0
    %582 = vmatpush2.bf16.msra.mxu0 0
    %583 = vmatprep.subr.bf16.mxu0 0
    %584 = vmatpush2.bf16.msra.mxu0 0
    %585 = vmatprep.subr.bf16.mxu0 0
    %586 = vmatpush2.bf16.msra.mxu0 0
    %587 = vmatprep.subr.bf16.mxu0 0
    %588 = vmatpush2.bf16.msra.mxu0 0
    %589 = vmatprep.subr.bf16.mxu0 0
    %590 = vmatpush2.bf16.msra.mxu0 0
    %591 = vmatprep.mubr.bf16.mxu0 0
    %592 = vmatmul.mubr.bf16.gmra.mxu0 0
    %v593 = vpop.f32.mrf.mxu0
    %v594 = vadd.f32 0.0, %v593
    %v595 = vpop.f32.mrf.mxu0
    %v596 = vadd.f32 0.0, %v595
    %v597 = vpop.f32.mrf.mxu0
    %v598 = vpop.f32.mrf.mxu0
    %599 = vdwg.mxu0
    %600 = vmatprep.subr.bf16.mxu0 %v526
    %601 = vmatpush1.bf16.msra.mxu0 %v525
    %602 = vmatprep.subr.bf16.mxu0 %v522
    %603 = vmatpush1.bf16.msra.mxu0 %v521
    %604 = vmatprep.subr.bf16.mxu0 %v518
    %605 = vmatpush1.bf16.msra.mxu0 %v517
    %606 = vmatprep.subr.bf16.mxu0 %v514
    %607 = vmatpush1.bf16.msra.mxu0 %v513
    %608 = vmatprep.subr.bf16.mxu0 %v510
    %609 = vmatpush1.bf16.msra.mxu0 %v509
    %610 = vmatprep.subr.bf16.mxu0 %v506
    %611 = vmatpush1.bf16.msra.mxu0 %v505
    %612 = vmatprep.subr.bf16.mxu0 %v502
    %613 = vmatpush1.bf16.msra.mxu0 %v501
    %614 = vmatprep.subr.bf16.mxu0 %v498
    %615 = vmatpush1.bf16.msra.mxu0 %v497
    %616 = vmatprep.subr.bf16.mxu0 0
    %617 = vmatpush2.bf16.msra.mxu0 0
    %618 = vmatprep.subr.bf16.mxu0 0
    %619 = vmatpush2.bf16.msra.mxu0 0
    %620 = vmatprep.subr.bf16.mxu0 0
    %621 = vmatpush2.bf16.msra.mxu0 0
    %622 = vmatprep.subr.bf16.mxu0 0
    %623 = vmatpush2.bf16.msra.mxu0 0
    %624 = vmatprep.subr.bf16.mxu0 0
    %625 = vmatpush2.bf16.msra.mxu0 0
    %626 = vmatprep.subr.bf16.mxu0 0
    %627 = vmatpush2.bf16.msra.mxu0 0
    %628 = vmatprep.subr.bf16.mxu0 0
    %629 = vmatpush2.bf16.msra.mxu0 0
    %630 = vmatprep.subr.bf16.mxu0 0
    %631 = vmatpush2.bf16.msra.mxu0 0
    %632 = vmatprep.mubr.bf16.mxu0 0
    %633 = vmatmul.mubr.bf16.gmra.mxu0 0
    %v634 = vpop.f32.mrf.mxu0
    %v635 = vadd.f32 0.0, %v634
    %v636 = vpop.f32.mrf.mxu0
    %v637 = vadd.f32 0.0, %v636
    %v638 = vpop.f32.mrf.mxu0
    %v639 = vpop.f32.mrf.mxu0
    %640 = vdwg.mxu0
    %v641 = vadd.f32 %v395, %v594
    %v642 = vadd.f32 %v396, %v596
    %v643 = vadd.f32 %v397, %v635
    %v644 = vadd.f32 %v398, %v637
    %v645 = vxor.u32 %v641, 2147483648
    %v646 = vmul.f32 %v645, 1.442695
    %v647 = vpow.pop %v646
    %v648 = vadd.f32 %v647, 1.0
    %v649 = vrcp.pop %v648
    %v650 = vmul.f32 1.0, %v649
    %v651 = vxor.u32 %v642, 2147483648
    %v652 = vmul.f32 %v651, 1.442695
    %v653 = vpow.pop %v652
    %v654 = vadd.f32 %v653, 1.0
    %v655 = vrcp.pop %v654
    %v656 = vmul.f32 1.0, %v655
    %v657 = vtanh.pop %v643
    %v658 = vxor.u32 %v644, 2147483648
    %v659 = vmul.f32 %v658, 1.442695
    %v660 = vpow.pop %v659
    %v661 = vadd.f32 %v660, 1.0
    %v662 = vrcp.pop %v661
    %v663 = vmul.f32 1.0, %v662
    %v664 = vmul.f32 %v656, 0.0
    %v665 = vmul.f32 %v650, %v657
    %v666 = vadd.f32 %v664, %v665
    %v667 = vtanh.pop %v666
    %v668 = vmul.f32 %v663, %v667
    %669 = vst [vmem:[#allocation8] sm:$0xff] %v668
    %v670 = vld [vmem:[#allocation2 + $0x20] sm:$0xff]
    %v671 = vld [vmem:[#allocation2 + $0x28] sm:$0xff]
    %v672 = vld [vmem:[#allocation2 + $0x30] sm:$0xff]
    %v673 = vld [vmem:[#allocation2 + $0x38] sm:$0xff]
    %v674 = vpack.c.bf16 %v668, %v668
    %675 = vmatprep.subr.bf16.mxu0 %v524
    %676 = vmatpush1.bf16.msra.mxu0 %v523
    %677 = vmatprep.subr.bf16.mxu0 %v520
    %678 = vmatpush1.bf16.msra.mxu0 %v519
    %679 = vmatprep.subr.bf16.mxu0 %v516
    %680 = vmatpush1.bf16.msra.mxu0 %v515
    %681 = vmatprep.subr.bf16.mxu0 %v512
    %682 = vmatpush1.bf16.msra.mxu0 %v511
    %683 = vmatprep.subr.bf16.mxu0 %v508
    %684 = vmatpush1.bf16.msra.mxu0 %v507
    %685 = vmatprep.subr.bf16.mxu0 %v504
    %686 = vmatpush1.bf16.msra.mxu0 %v503
    %687 = vmatprep.subr.bf16.mxu0 %v500
    %688 = vmatpush1.bf16.msra.mxu0 %v499
    %689 = vmatprep.subr.bf16.mxu0 %v496
    %690 = vmatpush1.bf16.msra.mxu0 %v495
    %691 = vmatprep.subr.bf16.mxu0 0
    %692 = vmatpush2.bf16.msra.mxu0 0
    %693 = vmatprep.subr.bf16.mxu0 0
    %694 = vmatpush2.bf16.msra.mxu0 0
    %695 = vmatprep.subr.bf16.mxu0 0
    %696 = vmatpush2.bf16.msra.mxu0 0
    %697 = vmatprep.subr.bf16.mxu0 0
    %698 = vmatpush2.bf16.msra.mxu0 0
    %699 = vmatprep.subr.bf16.mxu0 0
    %700 = vmatpush2.bf16.msra.mxu0 0
    %701 = vmatprep.subr.bf16.mxu0 0
    %702 = vmatpush2.bf16.msra.mxu0 0
    %703 = vmatprep.subr.bf16.mxu0 0
    %704 = vmatpush2.bf16.msra.mxu0 0
    %705 = vmatprep.subr.bf16.mxu0 0
    %706 = vmatpush2.bf16.msra.mxu0 0
    %707 = vmatprep.mubr.bf16.mxu0 0
    %708 = vmatmul.mubr.bf16.gmra.mxu0 %v674
    %v709 = vpop.f32.mrf.mxu0
    %v710 = vadd.f32 0.0, %v709
    %v711 = vpop.f32.mrf.mxu0
    %v712 = vadd.f32 0.0, %v711
    %v713 = vpop.f32.mrf.mxu0
    %v714 = vpop.f32.mrf.mxu0
    %715 = vdwg.mxu0
    %716 = vmatprep.subr.bf16.mxu0 %v526
    %717 = vmatpush1.bf16.msra.mxu0 %v525
    %718 = vmatprep.subr.bf16.mxu0 %v522
    %719 = vmatpush1.bf16.msra.mxu0 %v521
    %720 = vmatprep.subr.bf16.mxu0 %v518
    %721 = vmatpush1.bf16.msra.mxu0 %v517
    %722 = vmatprep.subr.bf16.mxu0 %v514
    %723 = vmatpush1.bf16.msra.mxu0 %v513
    %724 = vmatprep.subr.bf16.mxu0 %v510
    %725 = vmatpush1.bf16.msra.mxu0 %v509
    %726 = vmatprep.subr.bf16.mxu0 %v506
    %727 = vmatpush1.bf16.msra.mxu0 %v505
    %728 = vmatprep.subr.bf16.mxu0 %v502
    %729 = vmatpush1.bf16.msra.mxu0 %v501
    %730 = vmatprep.subr.bf16.mxu0 %v498
    %731 = vmatpush1.bf16.msra.mxu0 %v497
    %732 = vmatprep.subr.bf16.mxu0 0
    %733 = vmatpush2.bf16.msra.mxu0 0
    %734 = vmatprep.subr.bf16.mxu0 0
    %735 = vmatpush2.bf16.msra.mxu0 0
    %736 = vmatprep.subr.bf16.mxu0 0
    %737 = vmatpush2.bf16.msra.mxu0 0
    %738 = vmatprep.subr.bf16.mxu0 0
    %739 = vmatpush2.bf16.msra.mxu0 0
    %740 = vmatprep.subr.bf16.mxu0 0
    %741 = vmatpush2.bf16.msra.mxu0 0
    %742 = vmatprep.subr.bf16.mxu0 0
    %743 = vmatpush2.bf16.msra.mxu0 0
    %744 = vmatprep.subr.bf16.mxu0 0
    %745 = vmatpush2.bf16.msra.mxu0 0
    %746 = vmatprep.subr.bf16.mxu0 0
    %747 = vmatpush2.bf16.msra.mxu0 0
    %748 = vmatprep.mubr.bf16.mxu0 0
    %749 = vmatmul.mubr.bf16.gmra.mxu0 %v674
    %v750 = vpop.f32.mrf.mxu0
    %v751 = vadd.f32 0.0, %v750
    %v752 = vpop.f32.mrf.mxu0
    %v753 = vadd.f32 0.0, %v752
    %v754 = vpop.f32.mrf.mxu0
    %v755 = vpop.f32.mrf.mxu0
    %756 = vdwg.mxu0
    %v757 = vadd.f32 %v670, %v710
    %v758 = vadd.f32 %v671, %v712
    %v759 = vadd.f32 %v672, %v751
    %v760 = vadd.f32 %v673, %v753
    %v761 = vxor.u32 %v757, 2147483648
    %v762 = vmul.f32 %v761, 1.442695
    %v763 = vpow.pop %v762
    %v764 = vadd.f32 %v763, 1.0
    %v765 = vrcp.pop %v764
    %v766 = vmul.f32 1.0, %v765
    %v767 = vxor.u32 %v758, 2147483648
    %v768 = vmul.f32 %v767, 1.442695
    %v769 = vpow.pop %v768
    %v770 = vadd.f32 %v769, 1.0
    %v771 = vrcp.pop %v770
    %v772 = vmul.f32 1.0, %v771
    %v773 = vtanh.pop %v759
    %v774 = vxor.u32 %v760, 2147483648
    %v775 = vmul.f32 %v774, 1.442695
    %v776 = vpow.pop %v775
    %v777 = vadd.f32 %v776, 1.0
    %v778 = vrcp.pop %v777
    %v779 = vmul.f32 1.0, %v778
    %v780 = vmul.f32 %v772, %v666
    %v781 = vmul.f32 %v766, %v773
    %v782 = vadd.f32 %v780, %v781
    %v783 = vtanh.pop %v782
    %v784 = vmul.f32 %v779, %v783
    %s785 = scalar_lea.vmem [#allocation8], 8
    %786 = vst [vmem:[%s785] sm:$0xff] %v784
    %v787 = vld [vmem:[#allocation2 + $0x40] sm:$0xff]
    %v788 = vld [vmem:[#allocation2 + $0x48] sm:$0xff]
    %v789 = vld [vmem:[#allocation2 + $0x50] sm:$0xff]
    %v790 = vld [vmem:[#allocation2 + $0x58] sm:$0xff]
    %v791 = vpack.c.bf16 %v784, %v784
    %792 = vmatprep.subr.bf16.mxu0 %v524
    %793 = vmatpush1.bf16.msra.mxu0 %v523
    %794 = vmatprep.subr.bf16.mxu0 %v520
    %795 = vmatpush1.bf16.msra.mxu0 %v519
    %796 = vmatprep.subr.bf16.mxu0 %v516
    %797 = vmatpush1.bf16.msra.mxu0 %v515
    %798 = vmatprep.subr.bf16.mxu0 %v512
    %799 = vmatpush1.bf16.msra.mxu0 %v511
    %800 = vmatprep.subr.bf16.mxu0 %v508
    %801 = vmatpush1.bf16.msra.mxu0 %v507
    %802 = vmatprep.subr.bf16.mxu0 %v504
    %803 = vmatpush1.bf16.msra.mxu0 %v503
    %804 = vmatprep.subr.bf16.mxu0 %v500
    %805 = vmatpush1.bf16.msra.mxu0 %v499
    %806 = vmatprep.subr.bf16.mxu0 %v496
    %807 = vmatpush1.bf16.msra.mxu0 %v495
    %808 = vmatprep.subr.bf16.mxu0 0
    %809 = vmatpush2.bf16.msra.mxu0 0
    %810 = vmatprep.subr.bf16.mxu0 0
    %811 = vmatpush2.bf16.msra.mxu0 0
    %812 = vmatprep.subr.bf16.mxu0 0
    %813 = vmatpush2.bf16.msra.mxu0 0
    %814 = vmatprep.subr.bf16.mxu0 0
    %815 = vmatpush2.bf16.msra.mxu0 0
    %816 = vmatprep.subr.bf16.mxu0 0
    %817 = vmatpush2.bf16.msra.mxu0 0
    %818 = vmatprep.subr.bf16.mxu0 0
    %819 = vmatpush2.bf16.msra.mxu0 0
    %820 = vmatprep.subr.bf16.mxu0 0
    %821 = vmatpush2.bf16.msra.mxu0 0
    %822 = vmatprep.subr.bf16.mxu0 0
    %823 = vmatpush2.bf16.msra.mxu0 0
    %824 = vmatprep.mubr.bf16.mxu0 0
    %825 = vmatmul.mubr.bf16.gmra.mxu0 %v791
    %v826 = vpop.f32.mrf.mxu0
    %v827 = vadd.f32 0.0, %v826
    %v828 = vpop.f32.mrf.mxu0
    %v829 = vadd.f32 0.0, %v828
    %v830 = vpop.f32.mrf.mxu0
    %v831 = vpop.f32.mrf.mxu0
    %832 = vdwg.mxu0
    %833 = vmatprep.subr.bf16.mxu0 %v526
    %834 = vmatpush1.bf16.msra.mxu0 %v525
    %835 = vmatprep.subr.bf16.mxu0 %v522
    %836 = vmatpush1.bf16.msra.mxu0 %v521
    %837 = vmatprep.subr.bf16.mxu0 %v518
    %838 = vmatpush1.bf16.msra.mxu0 %v517
    %839 = vmatprep.subr.bf16.mxu0 %v514
    %840 = vmatpush1.bf16.msra.mxu0 %v513
    %841 = vmatprep.subr.bf16.mxu0 %v510
    %842 = vmatpush1.bf16.msra.mxu0 %v509
    %843 = vmatprep.subr.bf16.mxu0 %v506
    %844 = vmatpush1.bf16.msra.mxu0 %v505
    %845 = vmatprep.subr.bf16.mxu0 %v502
    %846 = vmatpush1.bf16.msra.mxu0 %v501
    %847 = vmatprep.subr.bf16.mxu0 %v498
    %848 = vmatpush1.bf16.msra.mxu0 %v497
    %849 = vmatprep.subr.bf16.mxu0 0
    %850 = vmatpush2.bf16.msra.mxu0 0
    %851 = vmatprep.subr.bf16.mxu0 0
    %852 = vmatpush2.bf16.msra.mxu0 0
    %853 = vmatprep.subr.bf16.mxu0 0
    %854 = vmatpush2.bf16.msra.mxu0 0
    %855 = vmatprep.subr.bf16.mxu0 0
    %856 = vmatpush2.bf16.msra.mxu0 0
    %857 = vmatprep.subr.bf16.mxu0 0
    %858 = vmatpush2.bf16.msra.mxu0 0
    %859 = vmatprep.subr.bf16.mxu0 0
    %860 = vmatpush2.bf16.msra.mxu0 0
    %861 = vmatprep.subr.bf16.mxu0 0
    %862 = vmatpush2.bf16.msra.mxu0 0
    %863 = vmatprep.subr.bf16.mxu0 0
    %864 = vmatpush2.bf16.msra.mxu0 0
    %865 = vmatprep.mubr.bf16.mxu0 0
    %866 = vmatmul.mubr.bf16.gmra.mxu0 %v791
    %v867 = vpop.f32.mrf.mxu0
    %v868 = vadd.f32 0.0, %v867
    %v869 = vpop.f32.mrf.mxu0
    %v870 = vadd.f32 0.0, %v869
    %v871 = vpop.f32.mrf.mxu0
    %v872 = vpop.f32.mrf.mxu0
    %873 = vdwg.mxu0
    %v874 = vadd.f32 %v787, %v827
    %v875 = vadd.f32 %v788, %v829
    %v876 = vadd.f32 %v789, %v868
    %v877 = vadd.f32 %v790, %v870
    %v878 = vxor.u32 %v874, 2147483648
    %v879 = vmul.f32 %v878, 1.442695
    %v880 = vpow.pop %v879
    %v881 = vadd.f32 %v880, 1.0
    %v882 = vrcp.pop %v881
    %v883 = vmul.f32 1.0, %v882
    %v884 = vxor.u32 %v875, 2147483648
    %v885 = vmul.f32 %v884, 1.442695
    %v886 = vpow.pop %v885
    %v887 = vadd.f32 %v886, 1.0
    %v888 = vrcp.pop %v887
    %v889 = vmul.f32 1.0, %v888
    %v890 = vtanh.pop %v876
    %v891 = vxor.u32 %v877, 2147483648
    %v892 = vmul.f32 %v891, 1.442695
    %v893 = vpow.pop %v892
    %v894 = vadd.f32 %v893, 1.0
    %v895 = vrcp.pop %v894
    %v896 = vmul.f32 1.0, %v895
    %v897 = vmul.f32 %v889, %v782
    %v898 = vmul.f32 %v883, %v890
    %v899 = vadd.f32 %v897, %v898
    %v900 = vtanh.pop %v899
    %v901 = vmul.f32 %v896, %v900
    %s902 = scalar_lea.vmem [#allocation8], 16
    %903 = vst [vmem:[%s902] sm:$0xff] %v901
    %v904 = vld [vmem:[#allocation2 + $0x60] sm:$0xff]
    %v905 = vld [vmem:[#allocation2 + $0x68] sm:$0xff]
    %v906 = vld [vmem:[#allocation2 + $0x70] sm:$0xff]
    %v907 = vld [vmem:[#allocation2 + $0x78] sm:$0xff]
    %v908 = vpack.c.bf16 %v901, %v901
    %909 = vmatprep.subr.bf16.mxu0 %v524
    %910 = vmatpush1.bf16.msra.mxu0 %v523
    %911 = vmatprep.subr.bf16.mxu0 %v520
    %912 = vmatpush1.bf16.msra.mxu0 %v519
    %913 = vmatprep.subr.bf16.mxu0 %v516
    %914 = vmatpush1.bf16.msra.mxu0 %v515
    %915 = vmatprep.subr.bf16.mxu0 %v512
    %916 = vmatpush1.bf16.msra.mxu0 %v511
    %917 = vmatprep.subr.bf16.mxu0 %v508
    %918 = vmatpush1.bf16.msra.mxu0 %v507
    %919 = vmatprep.subr.bf16.mxu0 %v504
    %920 = vmatpush1.bf16.msra.mxu0 %v503
    %921 = vmatprep.subr.bf16.mxu0 %v500
    %922 = vmatpush1.bf16.msra.mxu0 %v499
    %923 = vmatprep.subr.bf16.mxu0 %v496
    %924 = vmatpush1.bf16.msra.mxu0 %v495
    %925 = vmatprep.subr.bf16.mxu0 0
    %926 = vmatpush2.bf16.msra.mxu0 0
    %927 = vmatprep.subr.bf16.mxu0 0
    %928 = vmatpush2.bf16.msra.mxu0 0
    %929 = vmatprep.subr.bf16.mxu0 0
    %930 = vmatpush2.bf16.msra.mxu0 0
    %931 = vmatprep.subr.bf16.mxu0 0
    %932 = vmatpush2.bf16.msra.mxu0 0
    %933 = vmatprep.subr.bf16.mxu0 0
    %934 = vmatpush2.bf16.msra.mxu0 0
    %935 = vmatprep.subr.bf16.mxu0 0
    %936 = vmatpush2.bf16.msra.mxu0 0
    %937 = vmatprep.subr.bf16.mxu0 0
    %938 = vmatpush2.bf16.msra.mxu0 0
    %939 = vmatprep.subr.bf16.mxu0 0
    %940 = vmatpush2.bf16.msra.mxu0 0
    %941 = vmatprep.mubr.bf16.mxu0 0
    %942 = vmatmul.mubr.bf16.gmra.mxu0 %v908
    %v943 = vpop.f32.mrf.mxu0
    %v944 = vadd.f32 0.0, %v943
    %v945 = vpop.f32.mrf.mxu0
    %v946 = vadd.f32 0.0, %v945
    %v947 = vpop.f32.mrf.mxu0
    %v948 = vpop.f32.mrf.mxu0
    %949 = vdwg.mxu0
    %950 = vmatprep.subr.bf16.mxu0 %v526
    %951 = vmatpush1.bf16.msra.mxu0 %v525
    %952 = vmatprep.subr.bf16.mxu0 %v522
    %953 = vmatpush1.bf16.msra.mxu0 %v521
    %954 = vmatprep.subr.bf16.mxu0 %v518
    %955 = vmatpush1.bf16.msra.mxu0 %v517
    %956 = vmatprep.subr.bf16.mxu0 %v514
    %957 = vmatpush1.bf16.msra.mxu0 %v513
    %958 = vmatprep.subr.bf16.mxu0 %v510
    %959 = vmatpush1.bf16.msra.mxu0 %v509
    %960 = vmatprep.subr.bf16.mxu0 %v506
    %961 = vmatpush1.bf16.msra.mxu0 %v505
    %962 = vmatprep.subr.bf16.mxu0 %v502
    %963 = vmatpush1.bf16.msra.mxu0 %v501
    %964 = vmatprep.subr.bf16.mxu0 %v498
    %965 = vmatpush1.bf16.msra.mxu0 %v497
    %966 = vmatprep.subr.bf16.mxu0 0
    %967 = vmatpush2.bf16.msra.mxu0 0
    %968 = vmatprep.subr.bf16.mxu0 0
    %969 = vmatpush2.bf16.msra.mxu0 0
    %970 = vmatprep.subr.bf16.mxu0 0
    %971 = vmatpush2.bf16.msra.mxu0 0
    %972 = vmatprep.subr.bf16.mxu0 0
    %973 = vmatpush2.bf16.msra.mxu0 0
    %974 = vmatprep.subr.bf16.mxu0 0
    %975 = vmatpush2.bf16.msra.mxu0 0
    %976 = vmatprep.subr.bf16.mxu0 0
    %977 = vmatpush2.bf16.msra.mxu0 0
    %978 = vmatprep.subr.bf16.mxu0 0
    %979 = vmatpush2.bf16.msra.mxu0 0
    %980 = vmatprep.subr.bf16.mxu0 0
    %981 = vmatpush2.bf16.msra.mxu0 0
    %982 = vmatprep.mubr.bf16.mxu0 0
    %983 = vmatmul.mubr.bf16.gmra.mxu0 %v908
    %v984 = vpop.f32.mrf.mxu0
    %v985 = vadd.f32 0.0, %v984
    %v986 = vpop.f32.mrf.mxu0
    %v987 = vadd.f32 0.0, %v986
    %v988 = vpop.f32.mrf.mxu0
    %v989 = vpop.f32.mrf.mxu0
    %990 = vdwg.mxu0
    %v991 = vadd.f32 %v904, %v944
    %v992 = vadd.f32 %v905, %v946
    %v993 = vadd.f32 %v906, %v985
    %v994 = vadd.f32 %v907, %v987
    %v995 = vxor.u32 %v991, 2147483648
    %v996 = vmul.f32 %v995, 1.442695
    %v997 = vpow.pop %v996
    %v998 = vadd.f32 %v997, 1.0
    %v999 = vrcp.pop %v998
    %v1000 = vmul.f32 1.0, %v999
    %v1001 = vxor.u32 %v992, 2147483648
    %v1002 = vmul.f32 %v1001, 1.442695
    %v1003 = vpow.pop %v1002
    %v1004 = vadd.f32 %v1003, 1.0
    %v1005 = vrcp.pop %v1004
    %v1006 = vmul.f32 1.0, %v1005
    %v1007 = vtanh.pop %v993
    %v1008 = vxor.u32 %v994, 2147483648
    %v1009 = vmul.f32 %v1008, 1.442695
    %v1010 = vpow.pop %v1009
    %v1011 = vadd.f32 %v1010, 1.0
    %v1012 = vrcp.pop %v1011
    %v1013 = vmul.f32 1.0, %v1012
    %v1014 = vmul.f32 %v1006, %v899
    %v1015 = vmul.f32 %v1000, %v1007
    %v1016 = vadd.f32 %v1014, %v1015
    %v1017 = vtanh.pop %v1016
    %v1018 = vmul.f32 %v1013, %v1017
    %s1019 = scalar_lea.vmem [#allocation8], 24
    %1020 = vst [vmem:[%s1019] sm:$0xff] %v1018
    %v1021 = vld [vmem:[#allocation2 + $0x80] sm:$0xff]
    %v1022 = vld [vmem:[#allocation2 + $0x88] sm:$0xff]
    %v1023 = vld [vmem:[#allocation2 + $0x90] sm:$0xff]
    %v1024 = vld [vmem:[#allocation2 + $0x98] sm:$0xff]
    %v1025 = vpack.c.bf16 %v1018, %v1018
    %1026 = vmatprep.subr.bf16.mxu0 %v524
    %1027 = vmatpush1.bf16.msra.mxu0 %v523
    %1028 = vmatprep.subr.bf16.mxu0 %v520
    %1029 = vmatpush1.bf16.msra.mxu0 %v519
    %1030 = vmatprep.subr.bf16.mxu0 %v516
    %1031 = vmatpush1.bf16.msra.mxu0 %v515
    %1032 = vmatprep.subr.bf16.mxu0 %v512
    %1033 = vmatpush1.bf16.msra.mxu0 %v511
    %1034 = vmatprep.subr.bf16.mxu0 %v508
    %1035 = vmatpush1.bf16.msra.mxu0 %v507
    %1036 = vmatprep.subr.bf16.mxu0 %v504
    %1037 = vmatpush1.bf16.msra.mxu0 %v503
    %1038 = vmatprep.subr.bf16.mxu0 %v500
    %1039 = vmatpush1.bf16.msra.mxu0 %v499
    %1040 = vmatprep.subr.bf16.mxu0 %v496
    %1041 = vmatpush1.bf16.msra.mxu0 %v495
    %1042 = vmatprep.subr.bf16.mxu0 0
    %1043 = vmatpush2.bf16.msra.mxu0 0
    %1044 = vmatprep.subr.bf16.mxu0 0
    %1045 = vmatpush2.bf16.msra.mxu0 0
    %1046 = vmatprep.subr.bf16.mxu0 0
    %1047 = vmatpush2.bf16.msra.mxu0 0
    %1048 = vmatprep.subr.bf16.mxu0 0
    %1049 = vmatpush2.bf16.msra.mxu0 0
    %1050 = vmatprep.subr.bf16.mxu0 0
    %1051 = vmatpush2.bf16.msra.mxu0 0
    %1052 = vmatprep.subr.bf16.mxu0 0
    %1053 = vmatpush2.bf16.msra.mxu0 0
    %1054 = vmatprep.subr.bf16.mxu0 0
    %1055 = vmatpush2.bf16.msra.mxu0 0
    %1056 = vmatprep.subr.bf16.mxu0 0
    %1057 = vmatpush2.bf16.msra.mxu0 0
    %1058 = vmatprep.mubr.bf16.mxu0 0
    %1059 = vmatmul.mubr.bf16.gmra.mxu0 %v1025
    %v1060 = vpop.f32.mrf.mxu0
    %v1061 = vadd.f32 0.0, %v1060
    %v1062 = vpop.f32.mrf.mxu0
    %v1063 = vadd.f32 0.0, %v1062
    %v1064 = vpop.f32.mrf.mxu0
    %v1065 = vpop.f32.mrf.mxu0
    %1066 = vdwg.mxu0
    %1067 = vmatprep.subr.bf16.mxu0 %v526
    %1068 = vmatpush1.bf16.msra.mxu0 %v525
    %1069 = vmatprep.subr.bf16.mxu0 %v522
    %1070 = vmatpush1.bf16.msra.mxu0 %v521
    %1071 = vmatprep.subr.bf16.mxu0 %v518
    %1072 = vmatpush1.bf16.msra.mxu0 %v517
    %1073 = vmatprep.subr.bf16.mxu0 %v514
    %1074 = vmatpush1.bf16.msra.mxu0 %v513
    %1075 = vmatprep.subr.bf16.mxu0 %v510
    %1076 = vmatpush1.bf16.msra.mxu0 %v509
    %1077 = vmatprep.subr.bf16.mxu0 %v506
    %1078 = vmatpush1.bf16.msra.mxu0 %v505
    %1079 = vmatprep.subr.bf16.mxu0 %v502
    %1080 = vmatpush1.bf16.msra.mxu0 %v501
    %1081 = vmatprep.subr.bf16.mxu0 %v498
    %1082 = vmatpush1.bf16.msra.mxu0 %v497
    %1083 = vmatprep.subr.bf16.mxu0 0
    %1084 = vmatpush2.bf16.msra.mxu0 0
    %1085 = vmatprep.subr.bf16.mxu0 0
    %1086 = vmatpush2.bf16.msra.mxu0 0
    %1087 = vmatprep.subr.bf16.mxu0 0
    %1088 = vmatpush2.bf16.msra.mxu0 0
    %1089 = vmatprep.subr.bf16.mxu0 0
    %1090 = vmatpush2.bf16.msra.mxu0 0
    %1091 = vmatprep.subr.bf16.mxu0 0
    %1092 = vmatpush2.bf16.msra.mxu0 0
    %1093 = vmatprep.subr.bf16.mxu0 0
    %1094 = vmatpush2.bf16.msra.mxu0 0
    %1095 = vmatprep.subr.bf16.mxu0 0
    %1096 = vmatpush2.bf16.msra.mxu0 0
    %1097 = vmatprep.subr.bf16.mxu0 0
    %1098 = vmatpush2.bf16.msra.mxu0 0
    %1099 = vmatprep.mubr.bf16.mxu0 0
    %1100 = vmatmul.mubr.bf16.gmra.mxu0 %v1025
    %v1101 = vpop.f32.mrf.mxu0
    %v1102 = vadd.f32 0.0, %v1101
    %v1103 = vpop.f32.mrf.mxu0
    %v1104 = vadd.f32 0.0, %v1103
    %v1105 = vpop.f32.mrf.mxu0
    %v1106 = vpop.f32.mrf.mxu0
    %1107 = vdwg.mxu0
    %v1108 = vadd.f32 %v1021, %v1061
    %v1109 = vadd.f32 %v1022, %v1063
    %v1110 = vadd.f32 %v1023, %v1102
    %v1111 = vadd.f32 %v1024, %v1104
    %v1112 = vxor.u32 %v1108, 2147483648
    %v1113 = vmul.f32 %v1112, 1.442695
    %v1114 = vpow.pop %v1113
    %v1115 = vadd.f32 %v1114, 1.0
    %v1116 = vrcp.pop %v1115
    %v1117 = vmul.f32 1.0, %v1116
    %v1118 = vxor.u32 %v1109, 2147483648
    %v1119 = vmul.f32 %v1118, 1.442695
    %v1120 = vpow.pop %v1119
    %v1121 = vadd.f32 %v1120, 1.0
    %v1122 = vrcp.pop %v1121
    %v1123 = vmul.f32 1.0, %v1122
    %v1124 = vtanh.pop %v1110
    %v1125 = vxor.u32 %v1111, 2147483648
    %v1126 = vmul.f32 %v1125, 1.442695
    %v1127 = vpow.pop %v1126
    %v1128 = vadd.f32 %v1127, 1.0
    %v1129 = vrcp.pop %v1128
    %v1130 = vmul.f32 1.0, %v1129
    %v1131 = vmul.f32 %v1123, %v1016
    %v1132 = vmul.f32 %v1117, %v1124
    %v1133 = vadd.f32 %v1131, %v1132
    %v1134 = vtanh.pop %v1133
    %v1135 = vmul.f32 %v1130, %v1134
    %s1136 = scalar_lea.vmem [#allocation8], 32
    %1137 = vst [vmem:[%s1136] sm:$0xff] %v1135
    %v1138 = vld [vmem:[#allocation2 + $0xa0] sm:$0xff]
    %v1139 = vld [vmem:[#allocation2 + $0xa8] sm:$0xff]
    %v1140 = vld [vmem:[#allocation2 + $0xb0] sm:$0xff]
    %v1141 = vld [vmem:[#allocation2 + $0xb8] sm:$0xff]
    %v1142 = vpack.c.bf16 %v1135, %v1135
    %1143 = vmatprep.subr.bf16.mxu0 %v524
    %1144 = vmatpush1.bf16.msra.mxu0 %v523
    %1145 = vmatprep.subr.bf16.mxu0 %v520
    %1146 = vmatpush1.bf16.msra.mxu0 %v519
    %1147 = vmatprep.subr.bf16.mxu0 %v516
    %1148 = vmatpush1.bf16.msra.mxu0 %v515
    %1149 = vmatprep.subr.bf16.mxu0 %v512
    %1150 = vmatpush1.bf16.msra.mxu0 %v511
    %1151 = vmatprep.subr.bf16.mxu0 %v508
    %1152 = vmatpush1.bf16.msra.mxu0 %v507
    %1153 = vmatprep.subr.bf16.mxu0 %v504
    %1154 = vmatpush1.bf16.msra.mxu0 %v503
    %1155 = vmatprep.subr.bf16.mxu0 %v500
    %1156 = vmatpush1.bf16.msra.mxu0 %v499
    %1157 = vmatprep.subr.bf16.mxu0 %v496
    %1158 = vmatpush1.bf16.msra.mxu0 %v495
    %1159 = vmatprep.subr.bf16.mxu0 0
    %1160 = vmatpush2.bf16.msra.mxu0 0
    %1161 = vmatprep.subr.bf16.mxu0 0
    %1162 = vmatpush2.bf16.msra.mxu0 0
    %1163 = vmatprep.subr.bf16.mxu0 0
    %1164 = vmatpush2.bf16.msra.mxu0 0
    %1165 = vmatprep.subr.bf16.mxu0 0
    %1166 = vmatpush2.bf16.msra.mxu0 0
    %1167 = vmatprep.subr.bf16.mxu0 0
    %1168 = vmatpush2.bf16.msra.mxu0 0
    %1169 = vmatprep.subr.bf16.mxu0 0
    %1170 = vmatpush2.bf16.msra.mxu0 0
    %1171 = vmatprep.subr.bf16.mxu0 0
    %1172 = vmatpush2.bf16.msra.mxu0 0
    %1173 = vmatprep.subr.bf16.mxu0 0
    %1174 = vmatpush2.bf16.msra.mxu0 0
    %1175 = vmatprep.mubr.bf16.mxu0 0
    %1176 = vmatmul.mubr.bf16.gmra.mxu0 %v1142
    %v1177 = vpop.f32.mrf.mxu0
    %v1178 = vadd.f32 0.0, %v1177
    %v1179 = vpop.f32.mrf.mxu0
    %v1180 = vadd.f32 0.0, %v1179
    %v1181 = vpop.f32.mrf.mxu0
    %v1182 = vpop.f32.mrf.mxu0
    %1183 = vdwg.mxu0
    %1184 = vmatprep.subr.bf16.mxu0 %v526
    %1185 = vmatpush1.bf16.msra.mxu0 %v525
    %1186 = vmatprep.subr.bf16.mxu0 %v522
    %1187 = vmatpush1.bf16.msra.mxu0 %v521
    %1188 = vmatprep.subr.bf16.mxu0 %v518
    %1189 = vmatpush1.bf16.msra.mxu0 %v517
    %1190 = vmatprep.subr.bf16.mxu0 %v514
    %1191 = vmatpush1.bf16.msra.mxu0 %v513
    %1192 = vmatprep.subr.bf16.mxu0 %v510
    %1193 = vmatpush1.bf16.msra.mxu0 %v509
    %1194 = vmatprep.subr.bf16.mxu0 %v506
    %1195 = vmatpush1.bf16.msra.mxu0 %v505
    %1196 = vmatprep.subr.bf16.mxu0 %v502
    %1197 = vmatpush1.bf16.msra.mxu0 %v501
    %1198 = vmatprep.subr.bf16.mxu0 %v498
    %1199 = vmatpush1.bf16.msra.mxu0 %v497
    %1200 = vmatprep.subr.bf16.mxu0 0
    %1201 = vmatpush2.bf16.msra.mxu0 0
    %1202 = vmatprep.subr.bf16.mxu0 0
    %1203 = vmatpush2.bf16.msra.mxu0 0
    %1204 = vmatprep.subr.bf16.mxu0 0
    %1205 = vmatpush2.bf16.msra.mxu0 0
    %1206 = vmatprep.subr.bf16.mxu0 0
    %1207 = vmatpush2.bf16.msra.mxu0 0
    %1208 = vmatprep.subr.bf16.mxu0 0
    %1209 = vmatpush2.bf16.msra.mxu0 0
    %1210 = vmatprep.subr.bf16.mxu0 0
    %1211 = vmatpush2.bf16.msra.mxu0 0
    %1212 = vmatprep.subr.bf16.mxu0 0
    %1213 = vmatpush2.bf16.msra.mxu0 0
    %1214 = vmatprep.subr.bf16.mxu0 0
    %1215 = vmatpush2.bf16.msra.mxu0 0
    %1216 = vmatprep.mubr.bf16.mxu0 0
    %1217 = vmatmul.mubr.bf16.gmra.mxu0 %v1142
    %v1218 = vpop.f32.mrf.mxu0
    %v1219 = vadd.f32 0.0, %v1218
    %v1220 = vpop.f32.mrf.mxu0
    %v1221 = vadd.f32 0.0, %v1220
    %v1222 = vpop.f32.mrf.mxu0
    %v1223 = vpop.f32.mrf.mxu0
    %1224 = vdwg.mxu0
    %v1225 = vadd.f32 %v1138, %v1178
    %v1226 = vadd.f32 %v1139, %v1180
    %v1227 = vadd.f32 %v1140, %v1219
    %v1228 = vadd.f32 %v1141, %v1221
    %v1229 = vxor.u32 %v1225, 2147483648
    %v1230 = vmul.f32 %v1229, 1.442695
    %v1231 = vpow.pop %v1230
    %v1232 = vadd.f32 %v1231, 1.0
    %v1233 = vrcp.pop %v1232
    %v1234 = vmul.f32 1.0, %v1233
    %v1235 = vxor.u32 %v1226, 2147483648
    %v1236 = vmul.f32 %v1235, 1.442695
    %v1237 = vpow.pop %v1236
    %v1238 = vadd.f32 %v1237, 1.0
    %v1239 = vrcp.pop %v1238
    %v1240 = vmul.f32 1.0, %v1239
    %v1241 = vtanh.pop %v1227
    %v1242 = vxor.u32 %v1228, 2147483648
    %v1243 = vmul.f32 %v1242, 1.442695
    %v1244 = vpow.pop %v1243
    %v1245 = vadd.f32 %v1244, 1.0
    %v1246 = vrcp.pop %v1245
    %v1247 = vmul.f32 1.0, %v1246
    %v1248 = vmul.f32 %v1240, %v1133
    %v1249 = vmul.f32 %v1234, %v1241
    %v1250 = vadd.f32 %v1248, %v1249
    %v1251 = vtanh.pop %v1250
    %v1252 = vmul.f32 %v1247, %v1251
    %s1253 = scalar_lea.vmem [#allocation8], 40
    %1254 = vst [vmem:[%s1253] sm:$0xff] %v1252
    %v1255 = vld [vmem:[#allocation2 + $0xc0] sm:$0xff]
    %v1256 = vld [vmem:[#allocation2 + $0xc8] sm:$0xff]
    %v1257 = vld [vmem:[#allocation2 + $0xd0] sm:$0xff]
    %v1258 = vld [vmem:[#allocation2 + $0xd8] sm:$0xff]
    %v1259 = vpack.c.bf16 %v1252, %v1252
    %1260 = vmatprep.subr.bf16.mxu0 %v524
    %1261 = vmatpush1.bf16.msra.mxu0 %v523
    %1262 = vmatprep.subr.bf16.mxu0 %v520
    %1263 = vmatpush1.bf16.msra.mxu0 %v519
    %1264 = vmatprep.subr.bf16.mxu0 %v516
    %1265 = vmatpush1.bf16.msra.mxu0 %v515
    %1266 = vmatprep.subr.bf16.mxu0 %v512
    %1267 = vmatpush1.bf16.msra.mxu0 %v511
    %1268 = vmatprep.subr.bf16.mxu0 %v508
    %1269 = vmatpush1.bf16.msra.mxu0 %v507
    %1270 = vmatprep.subr.bf16.mxu0 %v504
    %1271 = vmatpush1.bf16.msra.mxu0 %v503
    %1272 = vmatprep.subr.bf16.mxu0 %v500
    %1273 = vmatpush1.bf16.msra.mxu0 %v499
    %1274 = vmatprep.subr.bf16.mxu0 %v496
    %1275 = vmatpush1.bf16.msra.mxu0 %v495
    %1276 = vmatprep.subr.bf16.mxu0 0
    %1277 = vmatpush2.bf16.msra.mxu0 0
    %1278 = vmatprep.subr.bf16.mxu0 0
    %1279 = vmatpush2.bf16.msra.mxu0 0
    %1280 = vmatprep.subr.bf16.mxu0 0
    %1281 = vmatpush2.bf16.msra.mxu0 0
    %1282 = vmatprep.subr.bf16.mxu0 0
    %1283 = vmatpush2.bf16.msra.mxu0 0
    %1284 = vmatprep.subr.bf16.mxu0 0
    %1285 = vmatpush2.bf16.msra.mxu0 0
    %1286 = vmatprep.subr.bf16.mxu0 0
    %1287 = vmatpush2.bf16.msra.mxu0 0
    %1288 = vmatprep.subr.bf16.mxu0 0
    %1289 = vmatpush2.bf16.msra.mxu0 0
    %1290 = vmatprep.subr.bf16.mxu0 0
    %1291 = vmatpush2.bf16.msra.mxu0 0
    %1292 = vmatprep.mubr.bf16.mxu0 0
    %1293 = vmatmul.mubr.bf16.gmra.mxu0 %v1259
    %v1294 = vpop.f32.mrf.mxu0
    %v1295 = vadd.f32 0.0, %v1294
    %v1296 = vpop.f32.mrf.mxu0
    %v1297 = vadd.f32 0.0, %v1296
    %v1298 = vpop.f32.mrf.mxu0
    %v1299 = vpop.f32.mrf.mxu0
    %1300 = vdwg.mxu0
    %1301 = vmatprep.subr.bf16.mxu0 %v526
    %1302 = vmatpush1.bf16.msra.mxu0 %v525
    %1303 = vmatprep.subr.bf16.mxu0 %v522
    %1304 = vmatpush1.bf16.msra.mxu0 %v521
    %1305 = vmatprep.subr.bf16.mxu0 %v518
    %1306 = vmatpush1.bf16.msra.mxu0 %v517
    %1307 = vmatprep.subr.bf16.mxu0 %v514
    %1308 = vmatpush1.bf16.msra.mxu0 %v513
    %1309 = vmatprep.subr.bf16.mxu0 %v510
    %1310 = vmatpush1.bf16.msra.mxu0 %v509
    %1311 = vmatprep.subr.bf16.mxu0 %v506
    %1312 = vmatpush1.bf16.msra.mxu0 %v505
    %1313 = vmatprep.subr.bf16.mxu0 %v502
    %1314 = vmatpush1.bf16.msra.mxu0 %v501
    %1315 = vmatprep.subr.bf16.mxu0 %v498
    %1316 = vmatpush1.bf16.msra.mxu0 %v497
    %1317 = vmatprep.subr.bf16.mxu0 0
    %1318 = vmatpush2.bf16.msra.mxu0 0
    %1319 = vmatprep.subr.bf16.mxu0 0
    %1320 = vmatpush2.bf16.msra.mxu0 0
    %1321 = vmatprep.subr.bf16.mxu0 0
    %1322 = vmatpush2.bf16.msra.mxu0 0
    %1323 = vmatprep.subr.bf16.mxu0 0
    %1324 = vmatpush2.bf16.msra.mxu0 0
    %1325 = vmatprep.subr.bf16.mxu0 0
    %1326 = vmatpush2.bf16.msra.mxu0 0
    %1327 = vmatprep.subr.bf16.mxu0 0
    %1328 = vmatpush2.bf16.msra.mxu0 0
    %1329 = vmatprep.subr.bf16.mxu0 0
    %1330 = vmatpush2.bf16.msra.mxu0 0
    %1331 = vmatprep.subr.bf16.mxu0 0
    %1332 = vmatpush2.bf16.msra.mxu0 0
    %1333 = vmatprep.mubr.bf16.mxu0 0
    %1334 = vmatmul.mubr.bf16.gmra.mxu0 %v1259
    %v1335 = vpop.f32.mrf.mxu0
    %v1336 = vadd.f32 0.0, %v1335
    %v1337 = vpop.f32.mrf.mxu0
    %v1338 = vadd.f32 0.0, %v1337
    %v1339 = vpop.f32.mrf.mxu0
    %v1340 = vpop.f32.mrf.mxu0
    %1341 = vdwg.mxu0
    %v1342 = vadd.f32 %v1255, %v1295
    %v1343 = vadd.f32 %v1256, %v1297
    %v1344 = vadd.f32 %v1257, %v1336
    %v1345 = vadd.f32 %v1258, %v1338
    %v1346 = vxor.u32 %v1342, 2147483648
    %v1347 = vmul.f32 %v1346, 1.442695
    %v1348 = vpow.pop %v1347
    %v1349 = vadd.f32 %v1348, 1.0
    %v1350 = vrcp.pop %v1349
    %v1351 = vmul.f32 1.0, %v1350
    %v1352 = vxor.u32 %v1343, 2147483648
    %v1353 = vmul.f32 %v1352, 1.442695
    %v1354 = vpow.pop %v1353
    %v1355 = vadd.f32 %v1354, 1.0
    %v1356 = vrcp.pop %v1355
    %v1357 = vmul.f32 1.0, %v1356
    %v1358 = vtanh.pop %v1344
    %v1359 = vxor.u32 %v1345, 2147483648
    %v1360 = vmul.f32 %v1359, 1.442695
    %v1361 = vpow.pop %v1360
    %v1362 = vadd.f32 %v1361, 1.0
    %v1363 = vrcp.pop %v1362
    %v1364 = vmul.f32 1.0, %v1363
    %v1365 = vmul.f32 %v1357, %v1250
    %v1366 = vmul.f32 %v1351, %v1358
    %v1367 = vadd.f32 %v1365, %v1366
    %v1368 = vtanh.pop %v1367
    %v1369 = vmul.f32 %v1364, %v1368
    %s1370 = scalar_lea.vmem [#allocation8], 48
    %1371 = vst [vmem:[%s1370] sm:$0xff] %v1369
    %v1372 = vld [vmem:[#allocation2 + $0xe0] sm:$0xff]
    %v1373 = vld [vmem:[#allocation2 + $0xe8] sm:$0xff]
    %v1374 = vld [vmem:[#allocation2 + $0xf0] sm:$0xff]
    %v1375 = vld [vmem:[#allocation2 + $0xf8] sm:$0xff]
    %v1376 = vpack.c.bf16 %v1369, %v1369
    %1377 = vmatprep.subr.bf16.mxu0 %v524
    %1378 = vmatpush1.bf16.msra.mxu0 %v523
    %1379 = vmatprep.subr.bf16.mxu0 %v520
    %1380 = vmatpush1.bf16.msra.mxu0 %v519
    %1381 = vmatprep.subr.bf16.mxu0 %v516
    %1382 = vmatpush1.bf16.msra.mxu0 %v515
    %1383 = vmatprep.subr.bf16.mxu0 %v512
    %1384 = vmatpush1.bf16.msra.mxu0 %v511
    %1385 = vmatprep.subr.bf16.mxu0 %v508
    %1386 = vmatpush1.bf16.msra.mxu0 %v507
    %1387 = vmatprep.subr.bf16.mxu0 %v504
    %1388 = vmatpush1.bf16.msra.mxu0 %v503
    %1389 = vmatprep.subr.bf16.mxu0 %v500
    %1390 = vmatpush1.bf16.msra.mxu0 %v499
    %1391 = vmatprep.subr.bf16.mxu0 %v496
    %1392 = vmatpush1.bf16.msra.mxu0 %v495
    %1393 = vmatprep.subr.bf16.mxu0 0
    %1394 = vmatpush2.bf16.msra.mxu0 0
    %1395 = vmatprep.subr.bf16.mxu0 0
    %1396 = vmatpush2.bf16.msra.mxu0 0
    %1397 = vmatprep.subr.bf16.mxu0 0
    %1398 = vmatpush2.bf16.msra.mxu0 0
    %1399 = vmatprep.subr.bf16.mxu0 0
    %1400 = vmatpush2.bf16.msra.mxu0 0
    %1401 = vmatprep.subr.bf16.mxu0 0
    %1402 = vmatpush2.bf16.msra.mxu0 0
    %1403 = vmatprep.subr.bf16.mxu0 0
    %1404 = vmatpush2.bf16.msra.mxu0 0
    %1405 = vmatprep.subr.bf16.mxu0 0
    %1406 = vmatpush2.bf16.msra.mxu0 0
    %1407 = vmatprep.subr.bf16.mxu0 0
    %1408 = vmatpush2.bf16.msra.mxu0 0
    %1409 = vmatprep.mubr.bf16.mxu0 0
    %1410 = vmatmul.mubr.bf16.gmra.mxu0 %v1376
    %v1411 = vpop.f32.mrf.mxu0
    %v1412 = vadd.f32 0.0, %v1411
    %v1413 = vpop.f32.mrf.mxu0
    %v1414 = vadd.f32 0.0, %v1413
    %v1415 = vpop.f32.mrf.mxu0
    %v1416 = vpop.f32.mrf.mxu0
    %1417 = vdwg.mxu0
    %1418 = vmatprep.subr.bf16.mxu0 %v526
    %1419 = vmatpush1.bf16.msra.mxu0 %v525
    %1420 = vmatprep.subr.bf16.mxu0 %v522
    %1421 = vmatpush1.bf16.msra.mxu0 %v521
    %1422 = vmatprep.subr.bf16.mxu0 %v518
    %1423 = vmatpush1.bf16.msra.mxu0 %v517
    %1424 = vmatprep.subr.bf16.mxu0 %v514
    %1425 = vmatpush1.bf16.msra.mxu0 %v513
    %1426 = vmatprep.subr.bf16.mxu0 %v510
    %1427 = vmatpush1.bf16.msra.mxu0 %v509
    %1428 = vmatprep.subr.bf16.mxu0 %v506
    %1429 = vmatpush1.bf16.msra.mxu0 %v505
    %1430 = vmatprep.subr.bf16.mxu0 %v502
    %1431 = vmatpush1.bf16.msra.mxu0 %v501
    %1432 = vmatprep.subr.bf16.mxu0 %v498
    %1433 = vmatpush1.bf16.msra.mxu0 %v497
    %1434 = vmatprep.subr.bf16.mxu0 0
    %1435 = vmatpush2.bf16.msra.mxu0 0
    %1436 = vmatprep.subr.bf16.mxu0 0
    %1437 = vmatpush2.bf16.msra.mxu0 0
    %1438 = vmatprep.subr.bf16.mxu0 0
    %1439 = vmatpush2.bf16.msra.mxu0 0
    %1440 = vmatprep.subr.bf16.mxu0 0
    %1441 = vmatpush2.bf16.msra.mxu0 0
    %1442 = vmatprep.subr.bf16.mxu0 0
    %1443 = vmatpush2.bf16.msra.mxu0 0
    %1444 = vmatprep.subr.bf16.mxu0 0
    %1445 = vmatpush2.bf16.msra.mxu0 0
    %1446 = vmatprep.subr.bf16.mxu0 0
    %1447 = vmatpush2.bf16.msra.mxu0 0
    %1448 = vmatprep.subr.bf16.mxu0 0
    %1449 = vmatpush2.bf16.msra.mxu0 0
    %1450 = vmatprep.mubr.bf16.mxu0 0
    %1451 = vmatmul.mubr.bf16.gmra.mxu0 %v1376
    %v1452 = vpop.f32.mrf.mxu0
    %v1453 = vadd.f32 0.0, %v1452
    %v1454 = vpop.f32.mrf.mxu0
    %v1455 = vadd.f32 0.0, %v1454
    %v1456 = vpop.f32.mrf.mxu0
    %v1457 = vpop.f32.mrf.mxu0
    %1458 = vdwg.mxu0
    %v1459 = vadd.f32 %v1372, %v1412
    %v1460 = vadd.f32 %v1373, %v1414
    %v1461 = vadd.f32 %v1374, %v1453
    %v1462 = vadd.f32 %v1375, %v1455
    %v1463 = vxor.u32 %v1459, 2147483648
    %v1464 = vmul.f32 %v1463, 1.442695
    %v1465 = vpow.pop %v1464
    %v1466 = vadd.f32 %v1465, 1.0
    %v1467 = vrcp.pop %v1466
    %v1468 = vmul.f32 1.0, %v1467
    %v1469 = vxor.u32 %v1460, 2147483648
    %v1470 = vmul.f32 %v1469, 1.442695
    %v1471 = vpow.pop %v1470
    %v1472 = vadd.f32 %v1471, 1.0
    %v1473 = vrcp.pop %v1472
    %v1474 = vmul.f32 1.0, %v1473
    %v1475 = vtanh.pop %v1461
    %v1476 = vxor.u32 %v1462, 2147483648
    %v1477 = vmul.f32 %v1476, 1.442695
    %v1478 = vpow.pop %v1477
    %v1479 = vadd.f32 %v1478, 1.0
    %v1480 = vrcp.pop %v1479
    %v1481 = vmul.f32 1.0, %v1480
    %v1482 = vmul.f32 %v1474, %v1367
    %v1483 = vmul.f32 %v1468, %v1475
    %v1484 = vadd.f32 %v1482, %v1483
    %v1485 = vtanh.pop %v1484
    %v1486 = vmul.f32 %v1481, %v1485
    %s1487 = scalar_lea.vmem [#allocation8], 56
    %1488 = vst [vmem:[%s1487] sm:$0xff] %v1486
    %v1489 = vld [vmem:[#allocation2 + $0x100] sm:$0xff]
    %v1490 = vld [vmem:[#allocation2 + $0x108] sm:$0xff]
    %v1491 = vld [vmem:[#allocation2 + $0x110] sm:$0xff]
    %v1492 = vld [vmem:[#allocation2 + $0x118] sm:$0xff]
    %v1493 = vpack.c.bf16 %v1486, %v1486
    %1494 = vmatprep.subr.bf16.mxu0 %v524
    %1495 = vmatpush1.bf16.msra.mxu0 %v523
    %1496 = vmatprep.subr.bf16.mxu0 %v520
    %1497 = vmatpush1.bf16.msra.mxu0 %v519
    %1498 = vmatprep.subr.bf16.mxu0 %v516
    %1499 = vmatpush1.bf16.msra.mxu0 %v515
    %1500 = vmatprep.subr.bf16.mxu0 %v512
    %1501 = vmatpush1.bf16.msra.mxu0 %v511
    %1502 = vmatprep.subr.bf16.mxu0 %v508
    %1503 = vmatpush1.bf16.msra.mxu0 %v507
    %1504 = vmatprep.subr.bf16.mxu0 %v504
    %1505 = vmatpush1.bf16.msra.mxu0 %v503
    %1506 = vmatprep.subr.bf16.mxu0 %v500
    %1507 = vmatpush1.bf16.msra.mxu0 %v499
    %1508 = vmatprep.subr.bf16.mxu0 %v496
    %1509 = vmatpush1.bf16.msra.mxu0 %v495
    %1510 = vmatprep.subr.bf16.mxu0 0
    %1511 = vmatpush2.bf16.msra.mxu0 0
    %1512 = vmatprep.subr.bf16.mxu0 0
    %1513 = vmatpush2.bf16.msra.mxu0 0
    %1514 = vmatprep.subr.bf16.mxu0 0
    %1515 = vmatpush2.bf16.msra.mxu0 0
    %1516 = vmatprep.subr.bf16.mxu0 0
    %1517 = vmatpush2.bf16.msra.mxu0 0
    %1518 = vmatprep.subr.bf16.mxu0 0
    %1519 = vmatpush2.bf16.msra.mxu0 0
    %1520 = vmatprep.subr.bf16.mxu0 0
    %1521 = vmatpush2.bf16.msra.mxu0 0
    %1522 = vmatprep.subr.bf16.mxu0 0
    %1523 = vmatpush2.bf16.msra.mxu0 0
    %1524 = vmatprep.subr.bf16.mxu0 0
    %1525 = vmatpush2.bf16.msra.mxu0 0
    %1526 = vmatprep.mubr.bf16.mxu0 0
    %1527 = vmatmul.mubr.bf16.gmra.mxu0 %v1493
    %v1528 = vpop.f32.mrf.mxu0
    %v1529 = vadd.f32 0.0, %v1528
    %v1530 = vpop.f32.mrf.mxu0
    %v1531 = vadd.f32 0.0, %v1530
    %v1532 = vpop.f32.mrf.mxu0
    %v1533 = vpop.f32.mrf.mxu0
    %1534 = vdwg.mxu0
    %1535 = vmatprep.subr.bf16.mxu0 %v526
    %1536 = vmatpush1.bf16.msra.mxu0 %v525
    %1537 = vmatprep.subr.bf16.mxu0 %v522
    %1538 = vmatpush1.bf16.msra.mxu0 %v521
    %1539 = vmatprep.subr.bf16.mxu0 %v518
    %1540 = vmatpush1.bf16.msra.mxu0 %v517
    %1541 = vmatprep.subr.bf16.mxu0 %v514
    %1542 = vmatpush1.bf16.msra.mxu0 %v513
    %1543 = vmatprep.subr.bf16.mxu0 %v510
    %1544 = vmatpush1.bf16.msra.mxu0 %v509
    %1545 = vmatprep.subr.bf16.mxu0 %v506
    %1546 = vmatpush1.bf16.msra.mxu0 %v505
    %1547 = vmatprep.subr.bf16.mxu0 %v502
    %1548 = vmatpush1.bf16.msra.mxu0 %v501
    %1549 = vmatprep.subr.bf16.mxu0 %v498
    %1550 = vmatpush1.bf16.msra.mxu0 %v497
    %1551 = vmatprep.subr.bf16.mxu0 0
    %1552 = vmatpush2.bf16.msra.mxu0 0
    %1553 = vmatprep.subr.bf16.mxu0 0
    %1554 = vmatpush2.bf16.msra.mxu0 0
    %1555 = vmatprep.subr.bf16.mxu0 0
    %1556 = vmatpush2.bf16.msra.mxu0 0
    %1557 = vmatprep.subr.bf16.mxu0 0
    %1558 = vmatpush2.bf16.msra.mxu0 0
    %1559 = vmatprep.subr.bf16.mxu0 0
    %1560 = vmatpush2.bf16.msra.mxu0 0
    %1561 = vmatprep.subr.bf16.mxu0 0
    %1562 = vmatpush2.bf16.msra.mxu0 0
    %1563 = vmatprep.subr.bf16.mxu0 0
    %1564 = vmatpush2.bf16.msra.mxu0 0
    %1565 = vmatprep.subr.bf16.mxu0 0
    %1566 = vmatpush2.bf16.msra.mxu0 0
    %1567 = vmatprep.mubr.bf16.mxu0 0
    %1568 = vmatmul.mubr.bf16.gmra.mxu0 %v1493
    %v1569 = vpop.f32.mrf.mxu0
    %v1570 = vadd.f32 0.0, %v1569
    %v1571 = vpop.f32.mrf.mxu0
    %v1572 = vadd.f32 0.0, %v1571
    %v1573 = vpop.f32.mrf.mxu0
    %v1574 = vpop.f32.mrf.mxu0
    %1575 = vdwg.mxu0
    %v1576 = vadd.f32 %v1489, %v1529
    %v1577 = vadd.f32 %v1490, %v1531
    %v1578 = vadd.f32 %v1491, %v1570
    %v1579 = vadd.f32 %v1492, %v1572
    %v1580 = vxor.u32 %v1576, 2147483648
    %v1581 = vmul.f32 %v1580, 1.442695
    %v1582 = vpow.pop %v1581
    %v1583 = vadd.f32 %v1582, 1.0
    %v1584 = vrcp.pop %v1583
    %v1585 = vmul.f32 1.0, %v1584
    %v1586 = vxor.u32 %v1577, 2147483648
    %v1587 = vmul.f32 %v1586, 1.442695
    %v1588 = vpow.pop %v1587
    %v1589 = vadd.f32 %v1588, 1.0
    %v1590 = vrcp.pop %v1589
    %v1591 = vmul.f32 1.0, %v1590
    %v1592 = vtanh.pop %v1578
    %v1593 = vxor.u32 %v1579, 2147483648
    %v1594 = vmul.f32 %v1593, 1.442695
    %v1595 = vpow.pop %v1594
    %v1596 = vadd.f32 %v1595, 1.0
    %v1597 = vrcp.pop %v1596
    %v1598 = vmul.f32 1.0, %v1597
    %v1599 = vmul.f32 %v1591, %v1484
    %v1600 = vmul.f32 %v1585, %v1592
    %v1601 = vadd.f32 %v1599, %v1600
    %v1602 = vtanh.pop %v1601
    %v1603 = vmul.f32 %v1598, %v1602
    %s1604 = scalar_lea.vmem [#allocation8], 64
    %1605 = vst [vmem:[%s1604] sm:$0xff] %v1603
    // Predicated region
    $region26: #{tpu_custom_call.1} parent=1 // pred_check
      _
    $region27: #{tpu_custom_call.1} parent=1 // pred_check_branch
      %1607 = sbr.rel (0) target = $region29
    $region28: #{tpu_custom_call.1} parent=1 // pred_region
      %s1609 = ssub.s32 1152, 1152
      %1610 = vsyncadd [#allocation5], %s1609
      %s1611 = sshll.u32 [#allocation8], 4
      %s1612 = int_to_ptr.vmem [resolvable:$true] %s1611
      %1617 = dma.vmem_to_hbm [thread:$0]  %s1612, 1152, %s4, [#allocation5], 128, 128, 8
    $region29: #{tpu_custom_call.1} parent=1 // pred_fallthru
      _
    // Predicated region
    $region30: #{tpu_custom_call.1} parent=1 // pred_check
      _
    $region31: #{tpu_custom_call.1} parent=1 // pred_check_branch
      %1619 = sbr.rel (0) target = $region33
    $region32: #{tpu_custom_call.1} parent=1 // pred_region
      %1620 = dma.done [#allocation5], 1152
    $region33: #{tpu_custom_call.1} parent=1 // pred_fallthru
      _
    %1621 = vsyncpa [#allocation4], 1
    %1622 = vsyncpa [#allocation7], 1
    %1623 = vsyncpa [#allocation5], 1

</llo_original>
